<compile_context>
chip_gen: v7x
topology: tpu7x:2x2x1
jax: 0.10.0
libtpu: 0.0.40
codegen_flags: <defaults>
</compile_context>

<pallas_src>
import jax
import jax.numpy as jnp
from jax import lax
from jax.experimental import pallas as pl
from jax.experimental.pallas import tpu as pltpu


_LANE_BLOCK = 128   # sentences per grid step (one full lane group)


def _mrf_nll_batch_kernel(psi_t_ref, unary_ref, tag1h_ref, out_ref):
    """One batch-block of B sentences, K tags on sublanes, batch on lanes.

    psi_t_ref : [K, K]   psi_t[j, i] = psi[i, j]   (shared across the batch)
    unary_ref : [L, K, B] per-position unary potentials, kernel layout
    tag1h_ref : [L, K, B] one-hot gold tags
    out_ref   : [1, B]    NLL = log Z - score(gold)   (lane-dense row)
    """
    psi_t = psi_t_ref[...]        # [K, K]
    unary = unary_ref[...]        # [L, K, B]
    tag1h = tag1h_ref[...]        # [L, K, B]

    L = unary.shape[0]            # static -> Python-level unrolling (L is small)

    # Hoisted once out of the recursion: column-max-shifted exp(psi).
    #   colmax[j]    = max_i psi[i, j]
    #   exp_psi_t[j,i] = exp(psi[i, j] - colmax[j])  in (0, 1]   -> stable for any psi
    colmax = jnp.max(psi_t, axis=1, keepdims=True)          # [K, 1]
    exp_psi_t = jnp.exp(psi_t - colmax)                      # [K, K]

    # --- gold-sequence score (accumulated alongside the recursion; off the critical
    #     dependence chain, so the VPU/MXU work here is free filler) ---
    gold = jnp.sum(unary[0] * tag1h[0], axis=0, keepdims=True)          # [1, B]

    # --- forward (sum-product) recursion in log space, fully unrolled ---
    #   alpha_t(j, b) = logsumexp_i( alpha_{t-1}(i, b) + psi(i, j) ) + unary(t, j, b)
    alpha = unary[0]                                                     # [K, B]
    for t in range(1, L):
        # gold unary + transition contribution for position t / edge (t-1 -> t).
        #   sel[j, b] = sum_i psi_t[j, i] * tag1h[t-1, i, b] = psi[T_{t-1}^b, j]
        gold = gold + jnp.sum(unary[t] * tag1h[t], axis=0, keepdims=True)
        sel = jnp.dot(psi_t, tag1h[t - 1], preferred_element_type=jnp.float32)   # [K, B]
        gold = gold + jnp.sum(tag1h[t] * sel, axis=0, keepdims=True)              # [1, B]

        # stabilized recursion step (hoisted exp(psi), per-batch max(alpha) shift):
        m = jnp.max(alpha, axis=0, keepdims=True)                        # [1, B]
        p = jnp.exp(alpha - m)                                           # [K, B], <= 1
        s = jnp.dot(exp_psi_t, p, preferred_element_type=jnp.float32)    # [K, B], in (0, K]
        alpha = jnp.log(s) + m + colmax + unary[t]                       # [K, B]

    # log partition function: logsumexp over tags (sublane reduce, lane-parallel batch)
    m_f = jnp.max(alpha, axis=0, keepdims=True)                          # [1, B]
    log_z = jnp.log(jnp.sum(jnp.exp(alpha - m_f), axis=0, keepdims=True)) + m_f

    out_ref[...] = log_z - gold                                          # [1, B]  NLL


@jax.jit
def mrf_lin_nll_batch(psi, unary_lkb, tag1h_lkb):
    """Batched MRF NLL.

    psi       : [K, K]      shared psi parameters
    unary_lkb : [L, K, B]   per-sentence unary potentials, kernel layout (B % 128 == 0)
    tag1h_lkb : [L, K, B]   per-sentence gold-tag one-hots, kernel layout
    returns   : [B]         -log Pr(T_b | m_b) per sentence
    """
    L, K, B = unary_lkb.shape
    assert B % _LANE_BLOCK == 0, B
    # One-time 1 KiB glue: the kernel only needs the transposed orientation of psi.
    psi_t = psi.astype(jnp.float32).T

    nll = pl.pallas_call(
        _mrf_nll_batch_kernel,
        out_shape=jax.ShapeDtypeStruct((1, B), jnp.float32),
        grid=(B // _LANE_BLOCK,),
        in_specs=[
            pl.BlockSpec((K, K), lambda b: (0, 0)),                        # psi^T (shared)
            pl.BlockSpec((L, K, _LANE_BLOCK), lambda b: (0, 0, b)),        # unary
            pl.BlockSpec((L, K, _LANE_BLOCK), lambda b: (0, 0, b)),        # tag one-hots
        ],
        out_specs=pl.BlockSpec((1, _LANE_BLOCK), lambda b: (0, b)),        # lane-dense NLL
        compiler_params=pltpu.CompilerParams(
            dimension_semantics=("parallel",)),                            # 2x on v7x (2 TCs)
    )(psi_t, unary_lkb.astype(jnp.float32), tag1h_lkb.astype(jnp.float32))
    return nll[0]


@jax.jit
def mrf_lin_forward(psi, unary, tag1h):
    """Single-sentence forward matching MRF_Lin(...).forward(psi): returns shape (1,).

    unary : [L, K], tag1h : [L, K].  The sentence is broadcast across one 128-lane block
    (the batched kernel is the only code path); lane 0 is returned.
    """
    L, K = unary.shape
    unary_b = jnp.broadcast_to(unary.astype(jnp.float32)[:, :, None], (L, K, _LANE_BLOCK))
    tag1h_b = jnp.broadcast_to(tag1h.astype(jnp.float32)[:, :, None], (L, K, _LANE_BLOCK))
    return mrf_lin_nll_batch(psi, unary_b, tag1h_b)[:1]


def _mrf_nll_ref_single(psi, unary, tag1h):
    """Pure-JAX reference for one sentence (unary/tag1h: [L, K])."""
    trans = tag1h[:-1].T @ tag1h[1:]
    score = jnp.sum(unary * tag1h) + jnp.sum(psi * trans)

    def step(alpha, u):
        new = jax.scipy.special.logsumexp(alpha[:, None] + psi, axis=0) + u
        return new, None

    alpha, _ = lax.scan(step, unary[0], unary[1:])
    return jax.scipy.special.logsumexp(alpha) - score


if __name__ == "__main__":
    key = jax.random.PRNGKey(0)
    k1, k2, k3, k4 = jax.random.split(key, 4)

    K = 16    # number of tags (the `tags` arg of MRF_Lin)
    L = 8     # sentence length (sentence.m), fixed across the batch
    V = 32    # vocabulary size for the synthetic linear unary features
    B = 256   # sentences per call (2 grid blocks of 128 lanes)

    # Deterministic synthetic "sentences" and model parameters (no checkpoint loading).
    W_emb = jax.random.normal(k1, (V, K), dtype=jnp.float32) * 0.5   # linear unary features
    pos = jax.random.randint(k2, (B, L), 0, V)                       # word ids per sentence
    T = jax.random.randint(k3, (B, L), 0, K)                         # gold tag sequences
    psi = jax.random.normal(k4, (K, K), dtype=jnp.float32) * 0.1     # psi parameters (input)

    # Glue in plain JAX: per-position unary potentials and gold one-hots.
    unary_blk = W_emb[pos]                                  # [B, L, K]
    tag1h_blk = jax.nn.one_hot(T, K, dtype=jnp.float32)     # [B, L, K]

    # Kernel layout: [L, K, B]  (tags on sublanes, batch on lanes).
    unary_lkb = jnp.transpose(unary_blk, (1, 2, 0))
    tag1h_lkb = jnp.transpose(tag1h_blk, (1, 2, 0))

    nll = jax.block_until_ready(mrf_lin_nll_batch(psi, unary_lkb, tag1h_lkb))

    ref = jax.vmap(_mrf_nll_ref_single, in_axes=(None, 0, 0))(psi, unary_blk, tag1h_blk)
    assert nll.shape == (B,), nll.shape
    max_err = float(jnp.max(jnp.abs(nll - ref)))
    assert max_err < 2e-3, max_err

    # Single-sentence forward() semantics of the original module: torch.Tensor([val]).
    out1 = jax.block_until_ready(mrf_lin_forward(psi, unary_blk[0], tag1h_blk[0]))
    assert out1.shape == (1,), out1.shape
    assert abs(float(out1[0]) - float(ref[0])) < 2e-3, (out1, ref[0])

    print("KERNEL_OK")
</pallas_src>

<mosaic_0001>
module attributes {stable_mosaic.version = 11 : i64} {
  func.func @_mrf_nll_batch_kernel(%arg0: i32, %arg1: memref<16x16xf32, #tpu.memory_space<vmem>>, %arg2: memref<8x16x128xf32, #tpu.memory_space<vmem>>, %arg3: memref<8x16x128xf32, #tpu.memory_space<vmem>>, %arg4: memref<1x128xf32, #tpu.memory_space<vmem>>) attributes {dimension_semantics = [#tpu.dimension_semantics<parallel>], iteration_bounds = array<i64: 2>, scalar_prefetch = 0 : i64, scratch_operands = 0 : i64, tpu.core_type = #tpu.core_type<tc>, window_params = [{pipeline_mode = #tpu.pipeline_mode<synchronous>, transform_indices = @transform_0, window_bounds = array<i64: 16, 16>}, {transform_indices = @transform_1, window_bounds = array<i64: 8, 16, 128>}, {transform_indices = @transform_2, window_bounds = array<i64: 8, 16, 128>}, {transform_indices = @transform_3, window_bounds = array<i64: 1, 128>}]} {
    %c0 = arith.constant 0 : index
    %c0_0 = arith.constant 0 : index
    %0 = vector.load %arg1[%c0, %c0_0] : memref<16x16xf32, #tpu.memory_space<vmem>>, vector<16x16xf32>
    %c0_1 = arith.constant 0 : index
    %c0_2 = arith.constant 0 : index
    %c0_3 = arith.constant 0 : index
    %1 = vector.load %arg2[%c0_1, %c0_2, %c0_3] : memref<8x16x128xf32, #tpu.memory_space<vmem>>, vector<8x16x128xf32>
    %c0_4 = arith.constant 0 : index
    %c0_5 = arith.constant 0 : index
    %c0_6 = arith.constant 0 : index
    %2 = vector.load %arg3[%c0_4, %c0_5, %c0_6] : memref<8x16x128xf32, #tpu.memory_space<vmem>>, vector<8x16x128xf32>
    %cst = arith.constant dense<0xFF800000> : vector<16xf32>
    %3 = vector.multi_reduction <maximumf>, %0, %cst [1] : vector<16x16xf32> to vector<16xf32>
    %4 = vector.shape_cast %3 : vector<16xf32> to vector<16x1xf32>
    %5 = vector.broadcast %4 : vector<16x1xf32> to vector<16x16xf32>
    %6 = arith.subf %0, %5 : vector<16x16xf32>
    %7 = math.exp %6 : vector<16x16xf32>
    %8 = vector.extract_strided_slice %1 {offsets = [0, 0, 0], sizes = [1, 16, 128], strides = [1, 1, 1]} : vector<8x16x128xf32> to vector<1x16x128xf32>
    %9 = vector.shape_cast %8 : vector<1x16x128xf32> to vector<16x128xf32>
    %10 = vector.extract_strided_slice %2 {offsets = [0, 0, 0], sizes = [1, 16, 128], strides = [1, 1, 1]} : vector<8x16x128xf32> to vector<1x16x128xf32>
    %11 = vector.shape_cast %10 : vector<1x16x128xf32> to vector<16x128xf32>
    %12 = arith.mulf %9, %11 : vector<16x128xf32>
    %cst_7 = arith.constant dense<0.000000e+00> : vector<128xf32>
    %13 = vector.multi_reduction <add>, %12, %cst_7 [0] : vector<16x128xf32> to vector<128xf32>
    %14 = vector.shape_cast %13 : vector<128xf32> to vector<1x128xf32>
    %15 = vector.extract_strided_slice %1 {offsets = [0, 0, 0], sizes = [1, 16, 128], strides = [1, 1, 1]} : vector<8x16x128xf32> to vector<1x16x128xf32>
    %16 = vector.shape_cast %15 : vector<1x16x128xf32> to vector<16x128xf32>
    %17 = vector.extract_strided_slice %1 {offsets = [1, 0, 0], sizes = [1, 16, 128], strides = [1, 1, 1]} : vector<8x16x128xf32> to vector<1x16x128xf32>
    %18 = vector.shape_cast %17 : vector<1x16x128xf32> to vector<16x128xf32>
    %19 = vector.extract_strided_slice %2 {offsets = [1, 0, 0], sizes = [1, 16, 128], strides = [1, 1, 1]} : vector<8x16x128xf32> to vector<1x16x128xf32>
    %20 = vector.shape_cast %19 : vector<1x16x128xf32> to vector<16x128xf32>
    %21 = arith.mulf %18, %20 : vector<16x128xf32>
    %cst_8 = arith.constant dense<0.000000e+00> : vector<128xf32>
    %22 = vector.multi_reduction <add>, %21, %cst_8 [0] : vector<16x128xf32> to vector<128xf32>
    %23 = vector.shape_cast %22 : vector<128xf32> to vector<1x128xf32>
    %24 = arith.addf %14, %23 : vector<1x128xf32>
    %25 = vector.extract_strided_slice %2 {offsets = [0, 0, 0], sizes = [1, 16, 128], strides = [1, 1, 1]} : vector<8x16x128xf32> to vector<1x16x128xf32>
    %26 = vector.shape_cast %25 : vector<1x16x128xf32> to vector<16x128xf32>
    %cst_9 = arith.constant dense<0.000000e+00> : vector<16x128xf32>
    %27 = tpu.matmul %0, %26, %cst_9 {dimension_numbers = #tpu.dot_dimension_numbers<[1], [0], [0], [1], [0, 0, 1, 1], [], []>} : vector<16x16xf32>, vector<16x128xf32>, vector<16x128xf32> -> vector<16x128xf32>
    %28 = vector.extract_strided_slice %2 {offsets = [1, 0, 0], sizes = [1, 16, 128], strides = [1, 1, 1]} : vector<8x16x128xf32> to vector<1x16x128xf32>
    %29 = vector.shape_cast %28 : vector<1x16x128xf32> to vector<16x128xf32>
    %30 = arith.mulf %29, %27 : vector<16x128xf32>
    %cst_10 = arith.constant dense<0.000000e+00> : vector<128xf32>
    %31 = vector.multi_reduction <add>, %30, %cst_10 [0] : vector<16x128xf32> to vector<128xf32>
    %32 = vector.shape_cast %31 : vector<128xf32> to vector<1x128xf32>
    %33 = arith.addf %24, %32 : vector<1x128xf32>
    %cst_11 = arith.constant dense<0xFF800000> : vector<128xf32>
    %34 = vector.multi_reduction <maximumf>, %16, %cst_11 [0] : vector<16x128xf32> to vector<128xf32>
    %35 = vector.shape_cast %34 : vector<128xf32> to vector<1x128xf32>
    %36 = vector.broadcast %35 : vector<1x128xf32> to vector<16x128xf32>
    %37 = arith.subf %16, %36 : vector<16x128xf32>
    %38 = math.exp %37 : vector<16x128xf32>
    %cst_12 = arith.constant dense<0.000000e+00> : vector<16x128xf32>
    %39 = tpu.matmul %7, %38, %cst_12 {dimension_numbers = #tpu.dot_dimension_numbers<[1], [0], [0], [1], [0, 0, 1, 1], [], []>} : vector<16x16xf32>, vector<16x128xf32>, vector<16x128xf32> -> vector<16x128xf32>
    %40 = math.log %39 : vector<16x128xf32>
    %41 = vector.broadcast %35 : vector<1x128xf32> to vector<16x128xf32>
    %42 = arith.addf %40, %41 : vector<16x128xf32>
    %43 = vector.broadcast %4 : vector<16x1xf32> to vector<16x128xf32>
    %44 = arith.addf %42, %43 : vector<16x128xf32>
    %45 = vector.extract_strided_slice %1 {offsets = [1, 0, 0], sizes = [1, 16, 128], strides = [1, 1, 1]} : vector<8x16x128xf32> to vector<1x16x128xf32>
    %46 = vector.shape_cast %45 : vector<1x16x128xf32> to vector<16x128xf32>
    %47 = arith.addf %44, %46 : vector<16x128xf32>
    %48 = vector.extract_strided_slice %1 {offsets = [2, 0, 0], sizes = [1, 16, 128], strides = [1, 1, 1]} : vector<8x16x128xf32> to vector<1x16x128xf32>
    %49 = vector.shape_cast %48 : vector<1x16x128xf32> to vector<16x128xf32>
    %50 = vector.extract_strided_slice %2 {offsets = [2, 0, 0], sizes = [1, 16, 128], strides = [1, 1, 1]} : vector<8x16x128xf32> to vector<1x16x128xf32>
    %51 = vector.shape_cast %50 : vector<1x16x128xf32> to vector<16x128xf32>
    %52 = arith.mulf %49, %51 : vector<16x128xf32>
    %cst_13 = arith.constant dense<0.000000e+00> : vector<128xf32>
    %53 = vector.multi_reduction <add>, %52, %cst_13 [0] : vector<16x128xf32> to vector<128xf32>
    %54 = vector.shape_cast %53 : vector<128xf32> to vector<1x128xf32>
    %55 = arith.addf %33, %54 : vector<1x128xf32>
    %56 = vector.extract_strided_slice %2 {offsets = [1, 0, 0], sizes = [1, 16, 128], strides = [1, 1, 1]} : vector<8x16x128xf32> to vector<1x16x128xf32>
    %57 = vector.shape_cast %56 : vector<1x16x128xf32> to vector<16x128xf32>
    %cst_14 = arith.constant dense<0.000000e+00> : vector<16x128xf32>
    %58 = tpu.matmul %0, %57, %cst_14 {dimension_numbers = #tpu.dot_dimension_numbers<[1], [0], [0], [1], [0, 0, 1, 1], [], []>} : vector<16x16xf32>, vector<16x128xf32>, vector<16x128xf32> -> vector<16x128xf32>
    %59 = vector.extract_strided_slice %2 {offsets = [2, 0, 0], sizes = [1, 16, 128], strides = [1, 1, 1]} : vector<8x16x128xf32> to vector<1x16x128xf32>
    %60 = vector.shape_cast %59 : vector<1x16x128xf32> to vector<16x128xf32>
    %61 = arith.mulf %60, %58 : vector<16x128xf32>
    %cst_15 = arith.constant dense<0.000000e+00> : vector<128xf32>
    %62 = vector.multi_reduction <add>, %61, %cst_15 [0] : vector<16x128xf32> to vector<128xf32>
    %63 = vector.shape_cast %62 : vector<128xf32> to vector<1x128xf32>
    %64 = arith.addf %55, %63 : vector<1x128xf32>
    %cst_16 = arith.constant dense<0xFF800000> : vector<128xf32>
    %65 = vector.multi_reduction <maximumf>, %47, %cst_16 [0] : vector<16x128xf32> to vector<128xf32>
    %66 = vector.shape_cast %65 : vector<128xf32> to vector<1x128xf32>
    %67 = vector.broadcast %66 : vector<1x128xf32> to vector<16x128xf32>
    %68 = arith.subf %47, %67 : vector<16x128xf32>
    %69 = math.exp %68 : vector<16x128xf32>
    %cst_17 = arith.constant dense<0.000000e+00> : vector<16x128xf32>
    %70 = tpu.matmul %7, %69, %cst_17 {dimension_numbers = #tpu.dot_dimension_numbers<[1], [0], [0], [1], [0, 0, 1, 1], [], []>} : vector<16x16xf32>, vector<16x128xf32>, vector<16x128xf32> -> vector<16x128xf32>
    %71 = math.log %70 : vector<16x128xf32>
    %72 = vector.broadcast %66 : vector<1x128xf32> to vector<16x128xf32>
    %73 = arith.addf %71, %72 : vector<16x128xf32>
    %74 = vector.broadcast %4 : vector<16x1xf32> to vector<16x128xf32>
    %75 = arith.addf %73, %74 : vector<16x128xf32>
    %76 = vector.extract_strided_slice %1 {offsets = [2, 0, 0], sizes = [1, 16, 128], strides = [1, 1, 1]} : vector<8x16x128xf32> to vector<1x16x128xf32>
    %77 = vector.shape_cast %76 : vector<1x16x128xf32> to vector<16x128xf32>
    %78 = arith.addf %75, %77 : vector<16x128xf32>
    %79 = vector.extract_strided_slice %1 {offsets = [3, 0, 0], sizes = [1, 16, 128], strides = [1, 1, 1]} : vector<8x16x128xf32> to vector<1x16x128xf32>
    %80 = vector.shape_cast %79 : vector<1x16x128xf32> to vector<16x128xf32>
    %81 = vector.extract_strided_slice %2 {offsets = [3, 0, 0], sizes = [1, 16, 128], strides = [1, 1, 1]} : vector<8x16x128xf32> to vector<1x16x128xf32>
    %82 = vector.shape_cast %81 : vector<1x16x128xf32> to vector<16x128xf32>
    %83 = arith.mulf %80, %82 : vector<16x128xf32>
    %cst_18 = arith.constant dense<0.000000e+00> : vector<128xf32>
    %84 = vector.multi_reduction <add>, %83, %cst_18 [0] : vector<16x128xf32> to vector<128xf32>
    %85 = vector.shape_cast %84 : vector<128xf32> to vector<1x128xf32>
    %86 = arith.addf %64, %85 : vector<1x128xf32>
    %87 = vector.extract_strided_slice %2 {offsets = [2, 0, 0], sizes = [1, 16, 128], strides = [1, 1, 1]} : vector<8x16x128xf32> to vector<1x16x128xf32>
    %88 = vector.shape_cast %87 : vector<1x16x128xf32> to vector<16x128xf32>
    %cst_19 = arith.constant dense<0.000000e+00> : vector<16x128xf32>
    %89 = tpu.matmul %0, %88, %cst_19 {dimension_numbers = #tpu.dot_dimension_numbers<[1], [0], [0], [1], [0, 0, 1, 1], [], []>} : vector<16x16xf32>, vector<16x128xf32>, vector<16x128xf32> -> vector<16x128xf32>
    %90 = vector.extract_strided_slice %2 {offsets = [3, 0, 0], sizes = [1, 16, 128], strides = [1, 1, 1]} : vector<8x16x128xf32> to vector<1x16x128xf32>
    %91 = vector.shape_cast %90 : vector<1x16x128xf32> to vector<16x128xf32>
    %92 = arith.mulf %91, %89 : vector<16x128xf32>
    %cst_20 = arith.constant dense<0.000000e+00> : vector<128xf32>
    %93 = vector.multi_reduction <add>, %92, %cst_20 [0] : vector<16x128xf32> to vector<128xf32>
    %94 = vector.shape_cast %93 : vector<128xf32> to vector<1x128xf32>
    %95 = arith.addf %86, %94 : vector<1x128xf32>
    %cst_21 = arith.constant dense<0xFF800000> : vector<128xf32>
    %96 = vector.multi_reduction <maximumf>, %78, %cst_21 [0] : vector<16x128xf32> to vector<128xf32>
    %97 = vector.shape_cast %96 : vector<128xf32> to vector<1x128xf32>
    %98 = vector.broadcast %97 : vector<1x128xf32> to vector<16x128xf32>
    %99 = arith.subf %78, %98 : vector<16x128xf32>
    %100 = math.exp %99 : vector<16x128xf32>
    %cst_22 = arith.constant dense<0.000000e+00> : vector<16x128xf32>
    %101 = tpu.matmul %7, %100, %cst_22 {dimension_numbers = #tpu.dot_dimension_numbers<[1], [0], [0], [1], [0, 0, 1, 1], [], []>} : vector<16x16xf32>, vector<16x128xf32>, vector<16x128xf32> -> vector<16x128xf32>
    %102 = math.log %101 : vector<16x128xf32>
    %103 = vector.broadcast %97 : vector<1x128xf32> to vector<16x128xf32>
    %104 = arith.addf %102, %103 : vector<16x128xf32>
    %105 = vector.broadcast %4 : vector<16x1xf32> to vector<16x128xf32>
    %106 = arith.addf %104, %105 : vector<16x128xf32>
    %107 = vector.extract_strided_slice %1 {offsets = [3, 0, 0], sizes = [1, 16, 128], strides = [1, 1, 1]} : vector<8x16x128xf32> to vector<1x16x128xf32>
    %108 = vector.shape_cast %107 : vector<1x16x128xf32> to vector<16x128xf32>
    %109 = arith.addf %106, %108 : vector<16x128xf32>
    %110 = vector.extract_strided_slice %1 {offsets = [4, 0, 0], sizes = [1, 16, 128], strides = [1, 1, 1]} : vector<8x16x128xf32> to vector<1x16x128xf32>
    %111 = vector.shape_cast %110 : vector<1x16x128xf32> to vector<16x128xf32>
    %112 = vector.extract_strided_slice %2 {offsets = [4, 0, 0], sizes = [1, 16, 128], strides = [1, 1, 1]} : vector<8x16x128xf32> to vector<1x16x128xf32>
    %113 = vector.shape_cast %112 : vector<1x16x128xf32> to vector<16x128xf32>
    %114 = arith.mulf %111, %113 : vector<16x128xf32>
    %cst_23 = arith.constant dense<0.000000e+00> : vector<128xf32>
    %115 = vector.multi_reduction <add>, %114, %cst_23 [0] : vector<16x128xf32> to vector<128xf32>
    %116 = vector.shape_cast %115 : vector<128xf32> to vector<1x128xf32>
    %117 = arith.addf %95, %116 : vector<1x128xf32>
    %118 = vector.extract_strided_slice %2 {offsets = [3, 0, 0], sizes = [1, 16, 128], strides = [1, 1, 1]} : vector<8x16x128xf32> to vector<1x16x128xf32>
    %119 = vector.shape_cast %118 : vector<1x16x128xf32> to vector<16x128xf32>
    %cst_24 = arith.constant dense<0.000000e+00> : vector<16x128xf32>
    %120 = tpu.matmul %0, %119, %cst_24 {dimension_numbers = #tpu.dot_dimension_numbers<[1], [0], [0], [1], [0, 0, 1, 1], [], []>} : vector<16x16xf32>, vector<16x128xf32>, vector<16x128xf32> -> vector<16x128xf32>
    %121 = vector.extract_strided_slice %2 {offsets = [4, 0, 0], sizes = [1, 16, 128], strides = [1, 1, 1]} : vector<8x16x128xf32> to vector<1x16x128xf32>
    %122 = vector.shape_cast %121 : vector<1x16x128xf32> to vector<16x128xf32>
    %123 = arith.mulf %122, %120 : vector<16x128xf32>
    %cst_25 = arith.constant dense<0.000000e+00> : vector<128xf32>
    %124 = vector.multi_reduction <add>, %123, %cst_25 [0] : vector<16x128xf32> to vector<128xf32>
    %125 = vector.shape_cast %124 : vector<128xf32> to vector<1x128xf32>
    %126 = arith.addf %117, %125 : vector<1x128xf32>
    %cst_26 = arith.constant dense<0xFF800000> : vector<128xf32>
    %127 = vector.multi_reduction <maximumf>, %109, %cst_26 [0] : vector<16x128xf32> to vector<128xf32>
    %128 = vector.shape_cast %127 : vector<128xf32> to vector<1x128xf32>
    %129 = vector.broadcast %128 : vector<1x128xf32> to vector<16x128xf32>
    %130 = arith.subf %109, %129 : vector<16x128xf32>
    %131 = math.exp %130 : vector<16x128xf32>
    %cst_27 = arith.constant dense<0.000000e+00> : vector<16x128xf32>
    %132 = tpu.matmul %7, %131, %cst_27 {dimension_numbers = #tpu.dot_dimension_numbers<[1], [0], [0], [1], [0, 0, 1, 1], [], []>} : vector<16x16xf32>, vector<16x128xf32>, vector<16x128xf32> -> vector<16x128xf32>
    %133 = math.log %132 : vector<16x128xf32>
    %134 = vector.broadcast %128 : vector<1x128xf32> to vector<16x128xf32>
    %135 = arith.addf %133, %134 : vector<16x128xf32>
    %136 = vector.broadcast %4 : vector<16x1xf32> to vector<16x128xf32>
    %137 = arith.addf %135, %136 : vector<16x128xf32>
    %138 = vector.extract_strided_slice %1 {offsets = [4, 0, 0], sizes = [1, 16, 128], strides = [1, 1, 1]} : vector<8x16x128xf32> to vector<1x16x128xf32>
    %139 = vector.shape_cast %138 : vector<1x16x128xf32> to vector<16x128xf32>
    %140 = arith.addf %137, %139 : vector<16x128xf32>
    %141 = vector.extract_strided_slice %1 {offsets = [5, 0, 0], sizes = [1, 16, 128], strides = [1, 1, 1]} : vector<8x16x128xf32> to vector<1x16x128xf32>
    %142 = vector.shape_cast %141 : vector<1x16x128xf32> to vector<16x128xf32>
    %143 = vector.extract_strided_slice %2 {offsets = [5, 0, 0], sizes = [1, 16, 128], strides = [1, 1, 1]} : vector<8x16x128xf32> to vector<1x16x128xf32>
    %144 = vector.shape_cast %143 : vector<1x16x128xf32> to vector<16x128xf32>
    %145 = arith.mulf %142, %144 : vector<16x128xf32>
    %cst_28 = arith.constant dense<0.000000e+00> : vector<128xf32>
    %146 = vector.multi_reduction <add>, %145, %cst_28 [0] : vector<16x128xf32> to vector<128xf32>
    %147 = vector.shape_cast %146 : vector<128xf32> to vector<1x128xf32>
    %148 = arith.addf %126, %147 : vector<1x128xf32>
    %149 = vector.extract_strided_slice %2 {offsets = [4, 0, 0], sizes = [1, 16, 128], strides = [1, 1, 1]} : vector<8x16x128xf32> to vector<1x16x128xf32>
    %150 = vector.shape_cast %149 : vector<1x16x128xf32> to vector<16x128xf32>
    %cst_29 = arith.constant dense<0.000000e+00> : vector<16x128xf32>
    %151 = tpu.matmul %0, %150, %cst_29 {dimension_numbers = #tpu.dot_dimension_numbers<[1], [0], [0], [1], [0, 0, 1, 1], [], []>} : vector<16x16xf32>, vector<16x128xf32>, vector<16x128xf32> -> vector<16x128xf32>
    %152 = vector.extract_strided_slice %2 {offsets = [5, 0, 0], sizes = [1, 16, 128], strides = [1, 1, 1]} : vector<8x16x128xf32> to vector<1x16x128xf32>
    %153 = vector.shape_cast %152 : vector<1x16x128xf32> to vector<16x128xf32>
    %154 = arith.mulf %153, %151 : vector<16x128xf32>
    %cst_30 = arith.constant dense<0.000000e+00> : vector<128xf32>
    %155 = vector.multi_reduction <add>, %154, %cst_30 [0] : vector<16x128xf32> to vector<128xf32>
    %156 = vector.shape_cast %155 : vector<128xf32> to vector<1x128xf32>
    %157 = arith.addf %148, %156 : vector<1x128xf32>
    %cst_31 = arith.constant dense<0xFF800000> : vector<128xf32>
    %158 = vector.multi_reduction <maximumf>, %140, %cst_31 [0] : vector<16x128xf32> to vector<128xf32>
    %159 = vector.shape_cast %158 : vector<128xf32> to vector<1x128xf32>
    %160 = vector.broadcast %159 : vector<1x128xf32> to vector<16x128xf32>
    %161 = arith.subf %140, %160 : vector<16x128xf32>
    %162 = math.exp %161 : vector<16x128xf32>
    %cst_32 = arith.constant dense<0.000000e+00> : vector<16x128xf32>
    %163 = tpu.matmul %7, %162, %cst_32 {dimension_numbers = #tpu.dot_dimension_numbers<[1], [0], [0], [1], [0, 0, 1, 1], [], []>} : vector<16x16xf32>, vector<16x128xf32>, vector<16x128xf32> -> vector<16x128xf32>
    %164 = math.log %163 : vector<16x128xf32>
    %165 = vector.broadcast %159 : vector<1x128xf32> to vector<16x128xf32>
    %166 = arith.addf %164, %165 : vector<16x128xf32>
    %167 = vector.broadcast %4 : vector<16x1xf32> to vector<16x128xf32>
    %168 = arith.addf %166, %167 : vector<16x128xf32>
    %169 = vector.extract_strided_slice %1 {offsets = [5, 0, 0], sizes = [1, 16, 128], strides = [1, 1, 1]} : vector<8x16x128xf32> to vector<1x16x128xf32>
    %170 = vector.shape_cast %169 : vector<1x16x128xf32> to vector<16x128xf32>
    %171 = arith.addf %168, %170 : vector<16x128xf32>
    %172 = vector.extract_strided_slice %1 {offsets = [6, 0, 0], sizes = [1, 16, 128], strides = [1, 1, 1]} : vector<8x16x128xf32> to vector<1x16x128xf32>
    %173 = vector.shape_cast %172 : vector<1x16x128xf32> to vector<16x128xf32>
    %174 = vector.extract_strided_slice %2 {offsets = [6, 0, 0], sizes = [1, 16, 128], strides = [1, 1, 1]} : vector<8x16x128xf32> to vector<1x16x128xf32>
    %175 = vector.shape_cast %174 : vector<1x16x128xf32> to vector<16x128xf32>
    %176 = arith.mulf %173, %175 : vector<16x128xf32>
    %cst_33 = arith.constant dense<0.000000e+00> : vector<128xf32>
    %177 = vector.multi_reduction <add>, %176, %cst_33 [0] : vector<16x128xf32> to vector<128xf32>
    %178 = vector.shape_cast %177 : vector<128xf32> to vector<1x128xf32>
    %179 = arith.addf %157, %178 : vector<1x128xf32>
    %180 = vector.extract_strided_slice %2 {offsets = [5, 0, 0], sizes = [1, 16, 128], strides = [1, 1, 1]} : vector<8x16x128xf32> to vector<1x16x128xf32>
    %181 = vector.shape_cast %180 : vector<1x16x128xf32> to vector<16x128xf32>
    %cst_34 = arith.constant dense<0.000000e+00> : vector<16x128xf32>
    %182 = tpu.matmul %0, %181, %cst_34 {dimension_numbers = #tpu.dot_dimension_numbers<[1], [0], [0], [1], [0, 0, 1, 1], [], []>} : vector<16x16xf32>, vector<16x128xf32>, vector<16x128xf32> -> vector<16x128xf32>
    %183 = vector.extract_strided_slice %2 {offsets = [6, 0, 0], sizes = [1, 16, 128], strides = [1, 1, 1]} : vector<8x16x128xf32> to vector<1x16x128xf32>
    %184 = vector.shape_cast %183 : vector<1x16x128xf32> to vector<16x128xf32>
    %185 = arith.mulf %184, %182 : vector<16x128xf32>
    %cst_35 = arith.constant dense<0.000000e+00> : vector<128xf32>
    %186 = vector.multi_reduction <add>, %185, %cst_35 [0] : vector<16x128xf32> to vector<128xf32>
    %187 = vector.shape_cast %186 : vector<128xf32> to vector<1x128xf32>
    %188 = arith.addf %179, %187 : vector<1x128xf32>
    %cst_36 = arith.constant dense<0xFF800000> : vector<128xf32>
    %189 = vector.multi_reduction <maximumf>, %171, %cst_36 [0] : vector<16x128xf32> to vector<128xf32>
    %190 = vector.shape_cast %189 : vector<128xf32> to vector<1x128xf32>
    %191 = vector.broadcast %190 : vector<1x128xf32> to vector<16x128xf32>
    %192 = arith.subf %171, %191 : vector<16x128xf32>
    %193 = math.exp %192 : vector<16x128xf32>
    %cst_37 = arith.constant dense<0.000000e+00> : vector<16x128xf32>
    %194 = tpu.matmul %7, %193, %cst_37 {dimension_numbers = #tpu.dot_dimension_numbers<[1], [0], [0], [1], [0, 0, 1, 1], [], []>} : vector<16x16xf32>, vector<16x128xf32>, vector<16x128xf32> -> vector<16x128xf32>
    %195 = math.log %194 : vector<16x128xf32>
    %196 = vector.broadcast %190 : vector<1x128xf32> to vector<16x128xf32>
    %197 = arith.addf %195, %196 : vector<16x128xf32>
    %198 = vector.broadcast %4 : vector<16x1xf32> to vector<16x128xf32>
    %199 = arith.addf %197, %198 : vector<16x128xf32>
    %200 = vector.extract_strided_slice %1 {offsets = [6, 0, 0], sizes = [1, 16, 128], strides = [1, 1, 1]} : vector<8x16x128xf32> to vector<1x16x128xf32>
    %201 = vector.shape_cast %200 : vector<1x16x128xf32> to vector<16x128xf32>
    %202 = arith.addf %199, %201 : vector<16x128xf32>
    %203 = vector.extract_strided_slice %1 {offsets = [7, 0, 0], sizes = [1, 16, 128], strides = [1, 1, 1]} : vector<8x16x128xf32> to vector<1x16x128xf32>
    %204 = vector.shape_cast %203 : vector<1x16x128xf32> to vector<16x128xf32>
    %205 = vector.extract_strided_slice %2 {offsets = [7, 0, 0], sizes = [1, 16, 128], strides = [1, 1, 1]} : vector<8x16x128xf32> to vector<1x16x128xf32>
    %206 = vector.shape_cast %205 : vector<1x16x128xf32> to vector<16x128xf32>
    %207 = arith.mulf %204, %206 : vector<16x128xf32>
    %cst_38 = arith.constant dense<0.000000e+00> : vector<128xf32>
    %208 = vector.multi_reduction <add>, %207, %cst_38 [0] : vector<16x128xf32> to vector<128xf32>
    %209 = vector.shape_cast %208 : vector<128xf32> to vector<1x128xf32>
    %210 = arith.addf %188, %209 : vector<1x128xf32>
    %211 = vector.extract_strided_slice %2 {offsets = [6, 0, 0], sizes = [1, 16, 128], strides = [1, 1, 1]} : vector<8x16x128xf32> to vector<1x16x128xf32>
    %212 = vector.shape_cast %211 : vector<1x16x128xf32> to vector<16x128xf32>
    %cst_39 = arith.constant dense<0.000000e+00> : vector<16x128xf32>
    %213 = tpu.matmul %0, %212, %cst_39 {dimension_numbers = #tpu.dot_dimension_numbers<[1], [0], [0], [1], [0, 0, 1, 1], [], []>} : vector<16x16xf32>, vector<16x128xf32>, vector<16x128xf32> -> vector<16x128xf32>
    %214 = vector.extract_strided_slice %2 {offsets = [7, 0, 0], sizes = [1, 16, 128], strides = [1, 1, 1]} : vector<8x16x128xf32> to vector<1x16x128xf32>
    %215 = vector.shape_cast %214 : vector<1x16x128xf32> to vector<16x128xf32>
    %216 = arith.mulf %215, %213 : vector<16x128xf32>
    %cst_40 = arith.constant dense<0.000000e+00> : vector<128xf32>
    %217 = vector.multi_reduction <add>, %216, %cst_40 [0] : vector<16x128xf32> to vector<128xf32>
    %218 = vector.shape_cast %217 : vector<128xf32> to vector<1x128xf32>
    %219 = arith.addf %210, %218 : vector<1x128xf32>
    %cst_41 = arith.constant dense<0xFF800000> : vector<128xf32>
    %220 = vector.multi_reduction <maximumf>, %202, %cst_41 [0] : vector<16x128xf32> to vector<128xf32>
    %221 = vector.shape_cast %220 : vector<128xf32> to vector<1x128xf32>
    %222 = vector.broadcast %221 : vector<1x128xf32> to vector<16x128xf32>
    %223 = arith.subf %202, %222 : vector<16x128xf32>
    %224 = math.exp %223 : vector<16x128xf32>
    %cst_42 = arith.constant dense<0.000000e+00> : vector<16x128xf32>
    %225 = tpu.matmul %7, %224, %cst_42 {dimension_numbers = #tpu.dot_dimension_numbers<[1], [0], [0], [1], [0, 0, 1, 1], [], []>} : vector<16x16xf32>, vector<16x128xf32>, vector<16x128xf32> -> vector<16x128xf32>
    %226 = math.log %225 : vector<16x128xf32>
    %227 = vector.broadcast %221 : vector<1x128xf32> to vector<16x128xf32>
    %228 = arith.addf %226, %227 : vector<16x128xf32>
    %229 = vector.broadcast %4 : vector<16x1xf32> to vector<16x128xf32>
    %230 = arith.addf %228, %229 : vector<16x128xf32>
    %231 = vector.extract_strided_slice %1 {offsets = [7, 0, 0], sizes = [1, 16, 128], strides = [1, 1, 1]} : vector<8x16x128xf32> to vector<1x16x128xf32>
    %232 = vector.shape_cast %231 : vector<1x16x128xf32> to vector<16x128xf32>
    %233 = arith.addf %230, %232 : vector<16x128xf32>
    %cst_43 = arith.constant dense<0xFF800000> : vector<128xf32>
    %234 = vector.multi_reduction <maximumf>, %233, %cst_43 [0] : vector<16x128xf32> to vector<128xf32>
    %235 = vector.shape_cast %234 : vector<128xf32> to vector<1x128xf32>
    %236 = vector.broadcast %235 : vector<1x128xf32> to vector<16x128xf32>
    %237 = arith.subf %233, %236 : vector<16x128xf32>
    %238 = math.exp %237 : vector<16x128xf32>
    %cst_44 = arith.constant dense<0.000000e+00> : vector<128xf32>
    %239 = vector.multi_reduction <add>, %238, %cst_44 [0] : vector<16x128xf32> to vector<128xf32>
    %240 = vector.shape_cast %239 : vector<128xf32> to vector<1x128xf32>
    %241 = math.log %240 : vector<1x128xf32>
    %242 = arith.addf %241, %235 : vector<1x128xf32>
    %243 = arith.subf %242, %219 : vector<1x128xf32>
    %c0_45 = arith.constant 0 : index
    %c0_46 = arith.constant 0 : index
    %244 = vector.load %arg4[%c0_45, %c0_46] : memref<1x128xf32, #tpu.memory_space<vmem>>, vector<1x128xf32>
    tpu.vector_store %arg4[%c0_45, %c0_46], %243 {strides = array<i32>} : memref<1x128xf32, #tpu.memory_space<vmem>>, vector<1x128xf32>,
    return
  }
  func.func @transform_0(%arg0: i32) -> (i32, i32) {
    %c0_i32 = arith.constant 0 : i32
    %c0_i32_0 = arith.constant 0 : i32
    %c0_i32_1 = arith.constant 0 : i32
    return %c0_i32, %c0_i32_0 : i32, i32
  }
  func.func @transform_1(%arg0: i32) -> (i32, i32, i32) {
    %c0_i32 = arith.constant 0 : i32
    %c0_i32_0 = arith.constant 0 : i32
    %c0_i32_1 = arith.constant 0 : i32
    return %c0_i32, %c0_i32_0, %arg0 : i32, i32, i32
  }
  func.func @transform_2(%arg0: i32) -> (i32, i32, i32) {
    %c0_i32 = arith.constant 0 : i32
    %c0_i32_0 = arith.constant 0 : i32
    %c0_i32_1 = arith.constant 0 : i32
    return %c0_i32, %c0_i32_0, %arg0 : i32, i32, i32
  }
  func.func @transform_3(%arg0: i32) -> (i32, i32) {
    %c0_i32 = arith.constant 0 : i32
    %c0_i32_0 = arith.constant 0 : i32
    return %c0_i32, %arg0 : i32, i32
  }
}

</mosaic_0001>

<llo_original>
// kernel: mrf_lin_nll_batch.1
$region0: #{mrf_lin_nll_batch.1}
  #allocation0 [shape = 'u32[]', space=smem, size = 0x4, offset = 0x4, fixed_abs, tag = 'smem constant byte address 0x4 - core index']
  #allocation1 [shape = 'u32[144,128]{1,0:T(1,128)}', space=vmem, size = 0x12000, scoped, tag = 'internal scratch']
  %s0 = inlined_call_operand.vmem [shape: f32[16,16], index: 0, kind: input, shape index: {}]
  %s1 = inlined_call_operand.hbm [shape: f32[8,16,256], index: 1, kind: input, shape index: {}]
  %s2 = inlined_call_operand.hbm [shape: f32[8,16,256], index: 2, kind: input, shape index: {}]
  %s3 = inlined_call_operand.hbm [shape: f32[1,256], index: 3, kind: output, shape index: {}]
  %s4 = sld [smem:[#allocation0]]
  $region53: #{mrf_lin_nll_batch.1} parent=0
    _
  %s6 = ssub.s32 1, %s4
  %s7 = scalar_select 0, %s6, %s4
  $region1: #{mrf_lin_nll_batch.1} parent=0
    #allocation2 [shape = 'u8[131072]{0}', space=vmem, size = 0x20000, scoped, tag = 'input window, operand 1']
    #allocation3 [shape = 's32[2]{0}', space=sflag, size = 0x8, scoped, tag = 'scoped memory for mrf_lin_nll_batch.1']
    #allocation4 [shape = 's32[2]{0}', space=sflag, size = 0x8, scoped, tag = 'scoped memory for mrf_lin_nll_batch.1']
    #allocation5 [shape = 'u8[131072]{0}', space=vmem, size = 0x20000, scoped, tag = 'input window, operand 2']
    #allocation6 [shape = 's32[2]{0}', space=sflag, size = 0x8, scoped, tag = 'scoped memory for mrf_lin_nll_batch.1']
    #allocation7 [shape = 'u8[1024]{0}', space=vmem, size = 0x400, scoped, tag = 'output window, operand 0']
    %8 = vsyncpa [#allocation3], 0
    %s9 = scalar_lea.sflag [#allocation3], 1
    %10 = vsyncpa %s9, 0
    %11 = vsyncpa [#allocation6], 0
    %s12 = scalar_lea.sflag [#allocation6], 1
    %13 = vsyncpa %s12, 0
    %14 = vsyncpa [#allocation4], 0
    %s15 = scalar_lea.sflag [#allocation4], 1
    %16 = vsyncpa %s15, 0
    loop: start=0, step=1, limit=4
    $region2: #{mrf_lin_nll_batch.1} parent=1 // loop_pre_header
      _
    $region3: #{mrf_lin_nll_batch.1} parent=1 // loop_header
      %s18 = sphi 0, %s22
      %p19 = scmp.ge.s32.totalorder %s18, 4
      %s26 = sphi 0, %s26
      %s28 = sphi 0, %s26
      %s29 = sphi 0, %s28
      %s43 = sphi 0, %s29
      %s49 = sphi 0, %s51
      %s52 = sphi 0, %s49
      %s53 = sphi 0, %s52
      %s69 = sphi 0, %s53
      %s75 = sphi 0, %s77
      %s78 = sphi 0, %s75
      %s79 = sphi 0, %s78
      %s95 = sphi 0, %s79
      %s101 = sphi 0, %s103
      %s104 = sphi 0, %s101
      %s105 = sphi 0, %s104
      %s121 = sphi 0, %s105
    $region4: #{mrf_lin_nll_batch.1} parent=1 // loop_header_branch
      %21 = sbr.rel (%p19) target = $region8
    $region5: #{mrf_lin_nll_batch.1} parent=1 // loop_body
      %s23 = ssub.s32 %s18, 1
      %s24 = ssub.s32 %s18, 2
      %s25 = sadd.s32 %s18, 1
      %s27 = sadd.s32 %s26, 1
      %p30 = scmp.eq.s32.totalorder %s18, 1
      %p31 = scmp.ne.s32.totalorder %s26, %s28
      %p32 = scmp.eq.s32.totalorder %s18, 0
      %p33 = por %p31, %p32
      %p34 = scmp.ne.s32.totalorder %s26, %s28
      %p35 = scmp.eq.s32.totalorder %s23, 1
      %p36 = por %p34, %p35
      %p37 = scmp.ne.s32.totalorder %s28, %s29
      %p38 = scmp.eq.s32.totalorder %s23, 0
      %p39 = por %p37, %p38
      %p40 = scmp.ne.s32.totalorder %s28, %s29
      %p41 = scmp.eq.s32.totalorder %s24, 1
      %p42 = por %p40, %p41
      %p44 = scmp.ne.s32.totalorder %s29, %s43
      %p45 = scmp.eq.s32.totalorder %s24, 0
      %p46 = por %p44, %p45
      %s47 = ssub.s32 %s18, %s25
      %p48 = scmp.eq.s32.totalorder %s47, 0
      %s50 = sadd.s32 %s49, 1
      %s51 = scalar_select %p48, %s49, %s50
      %p54 = pneg %p48
      %p55 = scmp.eq.s32.totalorder %s18, 1
      %p56 = por %p54, %p55
      %p57 = scmp.ne.s32.totalorder %s49, %s52
      %p58 = scmp.eq.s32.totalorder %s18, 0
      %p59 = por %p57, %p58
      %p60 = scmp.ne.s32.totalorder %s49, %s52
      %p61 = scmp.eq.s32.totalorder %s23, 1
      %p62 = por %p60, %p61
      %p63 = scmp.ne.s32.totalorder %s52, %s53
      %p64 = scmp.eq.s32.totalorder %s23, 0
      %p65 = por %p63, %p64
      %p66 = scmp.ne.s32.totalorder %s52, %s53
      %p67 = scmp.eq.s32.totalorder %s24, 1
      %p68 = por %p66, %p67
      %p70 = scmp.ne.s32.totalorder %s53, %s69
      %p71 = scmp.eq.s32.totalorder %s24, 0
      %p72 = por %p70, %p71
      %s73 = ssub.s32 %s18, %s25
      %p74 = scmp.eq.s32.totalorder %s73, 0
      %s76 = sadd.s32 %s75, 1
      %s77 = scalar_select %p74, %s75, %s76
      %p80 = pneg %p74
      %p81 = scmp.eq.s32.totalorder %s18, 1
      %p82 = por %p80, %p81
      %p83 = scmp.ne.s32.totalorder %s75, %s78
      %p84 = scmp.eq.s32.totalorder %s18, 0
      %p85 = por %p83, %p84
      %p86 = scmp.ne.s32.totalorder %s75, %s78
      %p87 = scmp.eq.s32.totalorder %s23, 1
      %p88 = por %p86, %p87
      %p89 = scmp.ne.s32.totalorder %s78, %s79
      %p90 = scmp.eq.s32.totalorder %s23, 0
      %p91 = por %p89, %p90
      %p92 = scmp.ne.s32.totalorder %s78, %s79
      %p93 = scmp.eq.s32.totalorder %s24, 1
      %p94 = por %p92, %p93
      %p96 = scmp.ne.s32.totalorder %s79, %s95
      %p97 = scmp.eq.s32.totalorder %s24, 0
      %p98 = por %p96, %p97
      %s99 = ssub.s32 %s18, %s25
      %p100 = scmp.eq.s32.totalorder %s99, 0
      %s102 = sadd.s32 %s101, 1
      %s103 = scalar_select %p100, %s101, %s102
      %p106 = pneg %p100
      %p107 = scmp.eq.s32.totalorder %s18, 1
      %p108 = por %p106, %p107
      %p109 = scmp.ne.s32.totalorder %s101, %s104
      %p110 = scmp.eq.s32.totalorder %s18, 0
      %p111 = por %p109, %p110
      %p112 = scmp.ne.s32.totalorder %s101, %s104
      %p113 = scmp.eq.s32.totalorder %s23, 1
      %p114 = por %p112, %p113
      %p115 = scmp.ne.s32.totalorder %s104, %s105
      %p116 = scmp.eq.s32.totalorder %s23, 0
      %p117 = por %p115, %p116
      %p118 = scmp.ne.s32.totalorder %s104, %s105
      %p119 = scmp.eq.s32.totalorder %s24, 1
      %p120 = por %p118, %p119
      %p122 = scmp.ne.s32.totalorder %s105, %s121
      %p123 = scmp.eq.s32.totalorder %s24, 0
      %p124 = por %p122, %p123
      %p125 = scmp.le.s32.totalorder 1, %s18
      %p126 = scmp.lt.s32.totalorder %s18, 3
      %p127 = pnand %p125, %p126
      %p128 = pneg %p127
      // Predicated region
      $region9: #{mrf_lin_nll_batch.1} parent=5 // pred_check
        _
      $region10: #{mrf_lin_nll_batch.1} parent=5 // pred_check_branch
        %130 = sbr.rel (%p127) target = $region12
      $region11: #{mrf_lin_nll_batch.1} parent=5 // pred_region
        %s131 = ssub.s32 %s18, 1
        // Predicated region
        $region13: #{mrf_lin_nll_batch.1} parent=11 // pred_check
          %p132 = pneg %p39
        $region14: #{mrf_lin_nll_batch.1} parent=11 // pred_check_branch
          %134 = sbr.rel (%p132) target = $region16
        $region15: #{mrf_lin_nll_batch.1} parent=11 // pred_region
          _
        $region16: #{mrf_lin_nll_batch.1} parent=11 // pred_fallthru
          _
      $region12: #{mrf_lin_nll_batch.1} parent=5 // pred_fallthru
        _
      %p135 = scmp.lt.s32.totalorder %s18, 2
      // Predicated region
      $region17: #{mrf_lin_nll_batch.1} parent=5 // pred_check
        %p136 = pneg %p135
      $region18: #{mrf_lin_nll_batch.1} parent=5 // pred_check_branch
        %138 = sbr.rel (%p136) target = $region20
      $region19: #{mrf_lin_nll_batch.1} parent=5 // pred_region
        // Predicated region
        $region21: #{mrf_lin_nll_batch.1} parent=19 // pred_check
          %p139 = pneg %p59
        $region22: #{mrf_lin_nll_batch.1} parent=19 // pred_check_branch
          %141 = sbr.rel (%p139) target = $region24
        $region23: #{mrf_lin_nll_batch.1} parent=19 // pred_region
          %s142 = sand.u32 %s49, 1
          %s143 = scalar_lea.sflag [#allocation3], %s142
          %s144 = sand.u32 %s49, 1
          %s145 = smul.addr %s144, 128
          %s146 = scalar_lea.vmem [#allocation2], %s145
          %s148 = ssub.s32 2048, 2048
          %149 = vsyncadd %s143, %s148
          %s150 = smul.addr %s18, 128
          %s151 = scalar_lea.hbm %s1, %s150
          %s152 = sshll.u32 %s146, 4
          %s153 = int_to_ptr.vmem [resolvable:$true] %s152
          %158 = dma.hbm_to_vmem [thread:$0]  %s151, 2048, %s153, %s143, 256, 128, 8
        $region24: #{mrf_lin_nll_batch.1} parent=19 // pred_fallthru
          _
        // Predicated region
        $region25: #{mrf_lin_nll_batch.1} parent=19 // pred_check
          %p159 = pneg %p85
        $region26: #{mrf_lin_nll_batch.1} parent=19 // pred_check_branch
          %161 = sbr.rel (%p159) target = $region28
        $region27: #{mrf_lin_nll_batch.1} parent=19 // pred_region
          %s162 = sand.u32 %s75, 1
          %s163 = scalar_lea.sflag [#allocation6], %s162
          %s164 = sand.u32 %s75, 1
          %s165 = smul.addr %s164, 128
          %s166 = scalar_lea.vmem [#allocation5], %s165
          %s168 = ssub.s32 2048, 2048
          %169 = vsyncadd %s163, %s168
          %s170 = smul.addr %s18, 128
          %s171 = scalar_lea.hbm %s2, %s170
          %s172 = sshll.u32 %s166, 4
          %s173 = int_to_ptr.vmem [resolvable:$true] %s172
          %178 = dma.hbm_to_vmem [thread:$0]  %s171, 2048, %s173, %s163, 256, 128, 8
        $region28: #{mrf_lin_nll_batch.1} parent=19 // pred_fallthru
          _
      $region20: #{mrf_lin_nll_batch.1} parent=5 // pred_fallthru
        _
      %p179 = scmp.le.s32.totalorder 1, %s18
      %p180 = scmp.lt.s32.totalorder %s18, 3
      %p181 = pnand %p179, %p180
      %p182 = pneg %p181
      // Predicated region
      $region29: #{mrf_lin_nll_batch.1} parent=5 // pred_check
        _
      $region30: #{mrf_lin_nll_batch.1} parent=5 // pred_check_branch
        %184 = sbr.rel (%p181) target = $region32
      $region31: #{mrf_lin_nll_batch.1} parent=5 // pred_region
        %s185 = ssub.s32 %s18, 1
        %s186 = sand.u32 %s52, 1
        %s187 = scalar_lea.sflag [#allocation3], %s186
        %s188 = sand.u32 %s52, 1
        %s189 = smul.addr %s188, 128
        %s190 = scalar_lea.vmem [#allocation2], %s189
        // Predicated region
        $region33: #{mrf_lin_nll_batch.1} parent=31 // pred_check
          %p191 = pneg %p65
        $region34: #{mrf_lin_nll_batch.1} parent=31 // pred_check_branch
          %193 = sbr.rel (%p191) target = $region36
        $region35: #{mrf_lin_nll_batch.1} parent=31 // pred_region
          %194 = dma.done %s187, 2048
        $region36: #{mrf_lin_nll_batch.1} parent=31 // pred_fallthru
          _
        %s195 = sand.u32 %s78, 1
        %s196 = scalar_lea.sflag [#allocation6], %s195
        %s197 = sand.u32 %s78, 1
        %s198 = smul.addr %s197, 128
        %s199 = scalar_lea.vmem [#allocation5], %s198
        // Predicated region
        $region37: #{mrf_lin_nll_batch.1} parent=31 // pred_check
          %p200 = pneg %p91
        $region38: #{mrf_lin_nll_batch.1} parent=31 // pred_check_branch
          %202 = sbr.rel (%p200) target = $region40
        $region39: #{mrf_lin_nll_batch.1} parent=31 // pred_region
          %203 = dma.done %s196, 2048
        $region40: #{mrf_lin_nll_batch.1} parent=31 // pred_fallthru
          _
        %p204 = pneg %p39
        %p205 = pneg %p36
        %s206 = sand.u32 %s52, 1
        %s207 = scalar_lea.sflag [#allocation3], %s206
        %s208 = sand.u32 %s52, 1
        %s209 = smul.addr %s208, 128
        %s210 = scalar_lea.vmem [#allocation2], %s209
        %p211 = pneg %p65
        %p212 = pneg %p62
        %s213 = sand.u32 %s78, 1
        %s214 = scalar_lea.sflag [#allocation6], %s213
        %s215 = sand.u32 %s78, 1
        %s216 = smul.addr %s215, 128
        %s217 = scalar_lea.vmem [#allocation5], %s216
        %p218 = pneg %p91
        %p219 = pneg %p88
        %p220 = pneg %p117
        %p221 = pneg %p114
        %s222 = sand.u32 %s104, 1
        %s223 = scalar_lea.sflag [#allocation4], %s222
        %s224 = sand.u32 %s104, 1
        %s225 = scalar_lea.vmem [#allocation7], %s224
        %v226 = vld [vmem:[%s0] sm:$0xff]
        %v227 = vld [vmem:[%s0 + $0x8] sm:$0xff]
        %v228 = vld [vmem:[%s190] sm:$0xff]
        %v229 = vld [vmem:[%s190 + $0x8] sm:$0xff]
        %v230 = vld [vmem:[%s190 + $0x10] sm:$0xff]
        %v231 = vld [vmem:[%s190 + $0x18] sm:$0xff]
        %v232 = vld [vmem:[%s190 + $0x20] sm:$0xff]
        %v233 = vld [vmem:[%s190 + $0x28] sm:$0xff]
        %v234 = vld [vmem:[%s190 + $0x30] sm:$0xff]
        %v235 = vld [vmem:[%s190 + $0x38] sm:$0xff]
        %v236 = vld [vmem:[%s190 + $0x40] sm:$0xff]
        %v237 = vld [vmem:[%s190 + $0x48] sm:$0xff]
        %v238 = vld [vmem:[%s190 + $0x50] sm:$0xff]
        %v239 = vld [vmem:[%s190 + $0x58] sm:$0xff]
        %v240 = vld [vmem:[%s190 + $0x60] sm:$0xff]
        %v241 = vld [vmem:[%s190 + $0x68] sm:$0xff]
        %v242 = vld [vmem:[%s190 + $0x70] sm:$0xff]
        %v243 = vld [vmem:[%s190 + $0x78] sm:$0xff]
        %v244 = vld [vmem:[%s199] sm:$0xff]
        %v245 = vld [vmem:[%s199 + $0x8] sm:$0xff]
        %v246 = vld [vmem:[%s199 + $0x10] sm:$0xff]
        %v247 = vld [vmem:[%s199 + $0x18] sm:$0xff]
        %v248 = vld [vmem:[%s199 + $0x20] sm:$0xff]
        %v249 = vld [vmem:[%s199 + $0x28] sm:$0xff]
        %v250 = vld [vmem:[%s199 + $0x30] sm:$0xff]
        %v251 = vld [vmem:[%s199 + $0x38] sm:$0xff]
        %v252 = vld [vmem:[%s199 + $0x40] sm:$0xff]
        %v253 = vld [vmem:[%s199 + $0x48] sm:$0xff]
        %v254 = vld [vmem:[%s199 + $0x50] sm:$0xff]
        %v255 = vld [vmem:[%s199 + $0x58] sm:$0xff]
        %v256 = vld [vmem:[%s199 + $0x60] sm:$0xff]
        %v257 = vld [vmem:[%s199 + $0x68] sm:$0xff]
        %v258 = vld [vmem:[%s199 + $0x70] sm:$0xff]
        %v259 = vld [vmem:[%s199 + $0x78] sm:$0xff]
        %vm260 = vcmask 130048
        %v261 = vsel %vm260, %v226, -inf
        %262 = vmax.xlane.f32.xlu0 %v261
        %v263 = vpop.xlane.xlu0 %262
        %v264 = vsel %vm260, %v227, -inf
        %265 = vmax.xlane.f32.xlu0 %v264
        %v266 = vpop.xlane.xlu0 %265
        %v267 = vsub.f32 %v226, %v263
        %v268 = vsub.f32 %v227, %v266
        %v269 = vmul.f32 %v267, 1.442695
        %v270 = vpow.pop %v269
        %v271 = vmul.f32 %v268, 1.442695
        %v272 = vpow.pop %v271
        %v273 = vmul.f32 %v228, %v244
        %v274 = vmul.f32 %v229, %v245
        %v275 = vadd.f32 %v273, %v274
        %v276 = vrot.slane %v275, 4
        %v277 = vadd.f32 %v275, %v276
        %v278 = vrot.slane %v277, 2
        %v279 = vadd.f32 %v277, %v278
        %v280 = vrot.slane %v279, 1
        %v281 = vadd.f32 %v279, %v280
        %v282 = vmul.f32 %v230, %v246
        %v283 = vmul.f32 %v231, %v247
        %v284 = vadd.f32 %v282, %v283
        %v285 = vrot.slane %v284, 4
        %v286 = vadd.f32 %v284, %v285
        %v287 = vrot.slane %v286, 2
        %v288 = vadd.f32 %v286, %v287
        %v289 = vrot.slane %v288, 1
        %v290 = vadd.f32 %v288, %v289
        %v291 = vadd.f32 %v281, %v290
        %v293 = vsel %vm260, %v226, 0
        %v296 = vsel %vm260, %v227, 0
        %298 = vmatprep.subr.mxu0 0.0
        %299 = vmatpush1.msra.mxu0 %v244
        %300 = vmatprep.subr.mxu0 0.0
        %301 = vmatpush1.msra.mxu0 %v245
        %302 = vmatprep.subr.mxu0 0.0
        %303 = vmatpush1.msra.mxu0 0.0
        %304 = vmatprep.subr.mxu0 0.0
        %305 = vmatpush1.msra.mxu0 0.0
        %306 = vmatprep.subr.mxu0 0.0
        %307 = vmatpush1.msra.mxu0 0.0
        %308 = vmatprep.subr.mxu0 0.0
        %309 = vmatpush1.msra.mxu0 0.0
        %310 = vmatprep.subr.mxu0 0.0
        %311 = vmatpush1.msra.mxu0 0.0
        %312 = vmatprep.subr.mxu0 0.0
        %313 = vmatpush1.msra.mxu0 0.0
        %314 = vmatprep.subr.mxu0 0.0
        %315 = vmatpush1.msra.mxu0 0.0
        %316 = vmatprep.subr.mxu0 0.0
        %317 = vmatpush1.msra.mxu0 0.0
        %318 = vmatprep.subr.mxu0 0.0
        %319 = vmatpush1.msra.mxu0 0.0
        %320 = vmatprep.subr.mxu0 0.0
        %321 = vmatpush1.msra.mxu0 0.0
        %322 = vmatprep.subr.mxu0 0.0
        %323 = vmatpush1.msra.mxu0 0.0
        %324 = vmatprep.subr.mxu0 0.0
        %325 = vmatpush1.msra.mxu0 0.0
        %326 = vmatprep.subr.mxu0 0.0
        %327 = vmatpush1.msra.mxu0 0.0
        %328 = vmatprep.subr.mxu0 0.0
        %329 = vmatpush1.msra.mxu0 0.0
        %330 = vmatprep.subr.mxu0 0.0
        %331 = vmatpush1.msra.mxu0 0.0
        %332 = vmatprep.subr.mxu0 0.0
        %333 = vmatpush1.msra.mxu0 0.0
        %334 = vmatprep.subr.mxu0 0.0
        %335 = vmatpush1.msra.mxu0 0.0
        %336 = vmatprep.subr.mxu0 0.0
        %337 = vmatpush1.msra.mxu0 0.0
        %338 = vmatprep.subr.mxu0 0.0
        %339 = vmatpush1.msra.mxu0 0.0
        %340 = vmatprep.subr.mxu0 0.0
        %341 = vmatpush1.msra.mxu0 0.0
        %342 = vmatprep.subr.mxu0 0.0
        %343 = vmatpush1.msra.mxu0 0.0
        %344 = vmatprep.subr.mxu0 0.0
        %345 = vmatpush1.msra.mxu0 0.0
        %346 = vmatprep.subr.mxu0 0.0
        %347 = vmatpush1.msra.mxu0 0.0
        %348 = vmatprep.subr.mxu0 0.0
        %349 = vmatpush1.msra.mxu0 0.0
        %350 = vmatprep.subr.mxu0 0.0
        %351 = vmatpush1.msra.mxu0 0.0
        %352 = vmatprep.subr.mxu0 0.0
        %353 = vmatpush1.msra.mxu0 0.0
        %354 = vmatprep.subr.mxu0 0.0
        %355 = vmatpush1.msra.mxu0 0.0
        %356 = vmatprep.subr.mxu0 0.0
        %357 = vmatpush1.msra.mxu0 0.0
        %358 = vmatprep.subr.mxu0 0.0
        %359 = vmatpush1.msra.mxu0 0.0
        %360 = vmatprep.subr.mxu0 0.0
        %361 = vmatpush1.msra.mxu0 0.0
        %362 = vmatprep.mubr.f32.mxu0 0.0
        %363 = vmatmul.mubr.f32.gmra.mrb[0].mxu0 %v293
        %v364 = vpop.f32.mrb[0].mxu0
        %v365 = vadd.f32 0.0, %v364
        %v366 = vpop.f32.mrb[0].mxu0
        %367 = vmatprep.mubr.f32.mxu0 0.0
        %368 = vmatmul.mubr.f32.gmra.mrb[0].mxu0 %v296
        %v369 = vpop.f32.mrb[0].mxu0
        %v370 = vadd.f32 0.0, %v369
        %v371 = vpop.f32.mrb[0].mxu0
        %372 = vdwg.mxu0
        %v373 = vmul.f32 %v246, %v365
        %v374 = vmul.f32 %v247, %v370
        %v375 = vadd.f32 %v373, %v374
        %v376 = vrot.slane %v375, 4
        %v377 = vadd.f32 %v375, %v376
        %v378 = vrot.slane %v377, 2
        %v379 = vadd.f32 %v377, %v378
        %v380 = vrot.slane %v379, 1
        %v381 = vadd.f32 %v379, %v380
        %v382 = vadd.f32 %v291, %v381
        %v383 = vmax.f32 %v228, %v229
        %v384 = vrot.slane %v383, 4
        %v385 = vmax.f32 %v383, %v384
        %v386 = vrot.slane %v385, 2
        %v387 = vmax.f32 %v385, %v386
        %v388 = vrot.slane %v387, 1
        %v389 = vmax.f32 %v387, %v388
        %v390 = vsub.f32 %v228, %v389
        %v391 = vsub.f32 %v229, %v389
        %v392 = vmul.f32 %v390, 1.442695
        %v393 = vpow.pop %v392
        %v394 = vmul.f32 %v391, 1.442695
        %v395 = vpow.pop %v394
        %v397 = vsel %vm260, %v270, 0
        %v400 = vsel %vm260, %v272, 0
        %402 = vmatprep.subr.mxu0 0.0
        %403 = vmatpush1.msra.mxu0 %v393
        %404 = vmatprep.subr.mxu0 0.0
        %405 = vmatpush1.msra.mxu0 %v395
        %406 = vmatprep.subr.mxu0 0.0
        %407 = vmatpush1.msra.mxu0 0.0
        %408 = vmatprep.subr.mxu0 0.0
        %409 = vmatpush1.msra.mxu0 0.0
        %410 = vmatprep.subr.mxu0 0.0
        %411 = vmatpush1.msra.mxu0 0.0
        %412 = vmatprep.subr.mxu0 0.0
        %413 = vmatpush1.msra.mxu0 0.0
        %414 = vmatprep.subr.mxu0 0.0
        %415 = vmatpush1.msra.mxu0 0.0
        %416 = vmatprep.subr.mxu0 0.0
        %417 = vmatpush1.msra.mxu0 0.0
        %418 = vmatprep.subr.mxu0 0.0
        %419 = vmatpush1.msra.mxu0 0.0
        %420 = vmatprep.subr.mxu0 0.0
        %421 = vmatpush1.msra.mxu0 0.0
        %422 = vmatprep.subr.mxu0 0.0
        %423 = vmatpush1.msra.mxu0 0.0
        %424 = vmatprep.subr.mxu0 0.0
        %425 = vmatpush1.msra.mxu0 0.0
        %426 = vmatprep.subr.mxu0 0.0
        %427 = vmatpush1.msra.mxu0 0.0
        %428 = vmatprep.subr.mxu0 0.0
        %429 = vmatpush1.msra.mxu0 0.0
        %430 = vmatprep.subr.mxu0 0.0
        %431 = vmatpush1.msra.mxu0 0.0
        %432 = vmatprep.subr.mxu0 0.0
        %433 = vmatpush1.msra.mxu0 0.0
        %434 = vmatprep.subr.mxu0 0.0
        %435 = vmatpush1.msra.mxu0 0.0
        %436 = vmatprep.subr.mxu0 0.0
        %437 = vmatpush1.msra.mxu0 0.0
        %438 = vmatprep.subr.mxu0 0.0
        %439 = vmatpush1.msra.mxu0 0.0
        %440 = vmatprep.subr.mxu0 0.0
        %441 = vmatpush1.msra.mxu0 0.0
        %442 = vmatprep.subr.mxu0 0.0
        %443 = vmatpush1.msra.mxu0 0.0
        %444 = vmatprep.subr.mxu0 0.0
        %445 = vmatpush1.msra.mxu0 0.0
        %446 = vmatprep.subr.mxu0 0.0
        %447 = vmatpush1.msra.mxu0 0.0
        %448 = vmatprep.subr.mxu0 0.0
        %449 = vmatpush1.msra.mxu0 0.0
        %450 = vmatprep.subr.mxu0 0.0
        %451 = vmatpush1.msra.mxu0 0.0
        %452 = vmatprep.subr.mxu0 0.0
        %453 = vmatpush1.msra.mxu0 0.0
        %454 = vmatprep.subr.mxu0 0.0
        %455 = vmatpush1.msra.mxu0 0.0
        %456 = vmatprep.subr.mxu0 0.0
        %457 = vmatpush1.msra.mxu0 0.0
        %458 = vmatprep.subr.mxu0 0.0
        %459 = vmatpush1.msra.mxu0 0.0
        %460 = vmatprep.subr.mxu0 0.0
        %461 = vmatpush1.msra.mxu0 0.0
        %462 = vmatprep.subr.mxu0 0.0
        %463 = vmatpush1.msra.mxu0 0.0
        %464 = vmatprep.subr.mxu0 0.0
        %465 = vmatpush1.msra.mxu0 0.0
        %466 = vmatprep.mubr.f32.mxu0 0.0
        %467 = vmatmul.mubr.f32.gmra.mrb[0].mxu0 %v397
        %v468 = vpop.f32.mrb[0].mxu0
        %v469 = vadd.f32 0.0, %v468
        %v470 = vpop.f32.mrb[0].mxu0
        %471 = vmatprep.mubr.f32.mxu0 0.0
        %472 = vmatmul.mubr.f32.gmra.mrb[0].mxu0 %v400
        %v473 = vpop.f32.mrb[0].mxu0
        %v474 = vadd.f32 0.0, %v473
        %v475 = vpop.f32.mrb[0].mxu0
        %476 = vdwg.mxu0
        %v477 = vlog2.pop %v469
        %v478 = vmul.f32 %v477, 0.6931472
        %v479 = vlog2.pop %v474
        %v480 = vmul.f32 %v479, 0.6931472
        %v481 = vadd.f32 %v478, %v389
        %v482 = vadd.f32 %v480, %v389
        %v483 = vadd.f32 %v481, %v263
        %v484 = vadd.f32 %v482, %v266
        %v485 = vadd.f32 %v483, %v230
        %v486 = vadd.f32 %v484, %v231
        %v487 = vmul.f32 %v232, %v248
        %v488 = vmul.f32 %v233, %v249
        %v489 = vadd.f32 %v487, %v488
        %v490 = vrot.slane %v489, 4
        %v491 = vadd.f32 %v489, %v490
        %v492 = vrot.slane %v491, 2
        %v493 = vadd.f32 %v491, %v492
        %v494 = vrot.slane %v493, 1
        %v495 = vadd.f32 %v493, %v494
        %v496 = vadd.f32 %v382, %v495
        %497 = vmatprep.subr.mxu0 0.0
        %498 = vmatpush1.msra.mxu0 %v246
        %499 = vmatprep.subr.mxu0 0.0
        %500 = vmatpush1.msra.mxu0 %v247
        %501 = vmatprep.subr.mxu0 0.0
        %502 = vmatpush1.msra.mxu0 0.0
        %503 = vmatprep.subr.mxu0 0.0
        %504 = vmatpush1.msra.mxu0 0.0
        %505 = vmatprep.subr.mxu0 0.0
        %506 = vmatpush1.msra.mxu0 0.0
        %507 = vmatprep.subr.mxu0 0.0
        %508 = vmatpush1.msra.mxu0 0.0
        %509 = vmatprep.subr.mxu0 0.0
        %510 = vmatpush1.msra.mxu0 0.0
        %511 = vmatprep.subr.mxu0 0.0
        %512 = vmatpush1.msra.mxu0 0.0
        %513 = vmatprep.subr.mxu0 0.0
        %514 = vmatpush1.msra.mxu0 0.0
        %515 = vmatprep.subr.mxu0 0.0
        %516 = vmatpush1.msra.mxu0 0.0
        %517 = vmatprep.subr.mxu0 0.0
        %518 = vmatpush1.msra.mxu0 0.0
        %519 = vmatprep.subr.mxu0 0.0
        %520 = vmatpush1.msra.mxu0 0.0
        %521 = vmatprep.subr.mxu0 0.0
        %522 = vmatpush1.msra.mxu0 0.0
        %523 = vmatprep.subr.mxu0 0.0
        %524 = vmatpush1.msra.mxu0 0.0
        %525 = vmatprep.subr.mxu0 0.0
        %526 = vmatpush1.msra.mxu0 0.0
        %527 = vmatprep.subr.mxu0 0.0
        %528 = vmatpush1.msra.mxu0 0.0
        %529 = vmatprep.subr.mxu0 0.0
        %530 = vmatpush1.msra.mxu0 0.0
        %531 = vmatprep.subr.mxu0 0.0
        %532 = vmatpush1.msra.mxu0 0.0
        %533 = vmatprep.subr.mxu0 0.0
        %534 = vmatpush1.msra.mxu0 0.0
        %535 = vmatprep.subr.mxu0 0.0
        %536 = vmatpush1.msra.mxu0 0.0
        %537 = vmatprep.subr.mxu0 0.0
        %538 = vmatpush1.msra.mxu0 0.0
        %539 = vmatprep.subr.mxu0 0.0
        %540 = vmatpush1.msra.mxu0 0.0
        %541 = vmatprep.subr.mxu0 0.0
        %542 = vmatpush1.msra.mxu0 0.0
        %543 = vmatprep.subr.mxu0 0.0
        %544 = vmatpush1.msra.mxu0 0.0
        %545 = vmatprep.subr.mxu0 0.0
        %546 = vmatpush1.msra.mxu0 0.0
        %547 = vmatprep.subr.mxu0 0.0
        %548 = vmatpush1.msra.mxu0 0.0
        %549 = vmatprep.subr.mxu0 0.0
        %550 = vmatpush1.msra.mxu0 0.0
        %551 = vmatprep.subr.mxu0 0.0
        %552 = vmatpush1.msra.mxu0 0.0
        %553 = vmatprep.subr.mxu0 0.0
        %554 = vmatpush1.msra.mxu0 0.0
        %555 = vmatprep.subr.mxu0 0.0
        %556 = vmatpush1.msra.mxu0 0.0
        %557 = vmatprep.subr.mxu0 0.0
        %558 = vmatpush1.msra.mxu0 0.0
        %559 = vmatprep.subr.mxu0 0.0
        %560 = vmatpush1.msra.mxu0 0.0
        %561 = vmatprep.mubr.f32.mxu0 0.0
        %562 = vmatmul.mubr.f32.gmra.mrb[0].mxu0 %v293
        %v563 = vpop.f32.mrb[0].mxu0
        %v564 = vadd.f32 0.0, %v563
        %v565 = vpop.f32.mrb[0].mxu0
        %566 = vmatprep.mubr.f32.mxu0 0.0
        %567 = vmatmul.mubr.f32.gmra.mrb[0].mxu0 %v296
        %v568 = vpop.f32.mrb[0].mxu0
        %v569 = vadd.f32 0.0, %v568
        %v570 = vpop.f32.mrb[0].mxu0
        %571 = vdwg.mxu0
        %v572 = vmul.f32 %v248, %v564
        %v573 = vmul.f32 %v249, %v569
        %v574 = vadd.f32 %v572, %v573
        %v575 = vrot.slane %v574, 4
        %v576 = vadd.f32 %v574, %v575
        %v577 = vrot.slane %v576, 2
        %v578 = vadd.f32 %v576, %v577
        %v579 = vrot.slane %v578, 1
        %v580 = vadd.f32 %v578, %v579
        %v581 = vadd.f32 %v496, %v580
        %v582 = vmax.f32 %v485, %v486
        %v583 = vrot.slane %v582, 4
        %v584 = vmax.f32 %v582, %v583
        %v585 = vrot.slane %v584, 2
        %v586 = vmax.f32 %v584, %v585
        %v587 = vrot.slane %v586, 1
        %v588 = vmax.f32 %v586, %v587
        %v589 = vsub.f32 %v485, %v588
        %v590 = vsub.f32 %v486, %v588
        %v591 = vmul.f32 %v589, 1.442695
        %v592 = vpow.pop %v591
        %v593 = vmul.f32 %v590, 1.442695
        %v594 = vpow.pop %v593
        %595 = vmatprep.subr.mxu0 0.0
        %596 = vmatpush1.msra.mxu0 %v592
        %597 = vmatprep.subr.mxu0 0.0
        %598 = vmatpush1.msra.mxu0 %v594
        %599 = vmatprep.subr.mxu0 0.0
        %600 = vmatpush1.msra.mxu0 0.0
        %601 = vmatprep.subr.mxu0 0.0
        %602 = vmatpush1.msra.mxu0 0.0
        %603 = vmatprep.subr.mxu0 0.0
        %604 = vmatpush1.msra.mxu0 0.0
        %605 = vmatprep.subr.mxu0 0.0
        %606 = vmatpush1.msra.mxu0 0.0
        %607 = vmatprep.subr.mxu0 0.0
        %608 = vmatpush1.msra.mxu0 0.0
        %609 = vmatprep.subr.mxu0 0.0
        %610 = vmatpush1.msra.mxu0 0.0
        %611 = vmatprep.subr.mxu0 0.0
        %612 = vmatpush1.msra.mxu0 0.0
        %613 = vmatprep.subr.mxu0 0.0
        %614 = vmatpush1.msra.mxu0 0.0
        %615 = vmatprep.subr.mxu0 0.0
        %616 = vmatpush1.msra.mxu0 0.0
        %617 = vmatprep.subr.mxu0 0.0
        %618 = vmatpush1.msra.mxu0 0.0
        %619 = vmatprep.subr.mxu0 0.0
        %620 = vmatpush1.msra.mxu0 0.0
        %621 = vmatprep.subr.mxu0 0.0
        %622 = vmatpush1.msra.mxu0 0.0
        %623 = vmatprep.subr.mxu0 0.0
        %624 = vmatpush1.msra.mxu0 0.0
        %625 = vmatprep.subr.mxu0 0.0
        %626 = vmatpush1.msra.mxu0 0.0
        %627 = vmatprep.subr.mxu0 0.0
        %628 = vmatpush1.msra.mxu0 0.0
        %629 = vmatprep.subr.mxu0 0.0
        %630 = vmatpush1.msra.mxu0 0.0
        %631 = vmatprep.subr.mxu0 0.0
        %632 = vmatpush1.msra.mxu0 0.0
        %633 = vmatprep.subr.mxu0 0.0
        %634 = vmatpush1.msra.mxu0 0.0
        %635 = vmatprep.subr.mxu0 0.0
        %636 = vmatpush1.msra.mxu0 0.0
        %637 = vmatprep.subr.mxu0 0.0
        %638 = vmatpush1.msra.mxu0 0.0
        %639 = vmatprep.subr.mxu0 0.0
        %640 = vmatpush1.msra.mxu0 0.0
        %641 = vmatprep.subr.mxu0 0.0
        %642 = vmatpush1.msra.mxu0 0.0
        %643 = vmatprep.subr.mxu0 0.0
        %644 = vmatpush1.msra.mxu0 0.0
        %645 = vmatprep.subr.mxu0 0.0
        %646 = vmatpush1.msra.mxu0 0.0
        %647 = vmatprep.subr.mxu0 0.0
        %648 = vmatpush1.msra.mxu0 0.0
        %649 = vmatprep.subr.mxu0 0.0
        %650 = vmatpush1.msra.mxu0 0.0
        %651 = vmatprep.subr.mxu0 0.0
        %652 = vmatpush1.msra.mxu0 0.0
        %653 = vmatprep.subr.mxu0 0.0
        %654 = vmatpush1.msra.mxu0 0.0
        %655 = vmatprep.subr.mxu0 0.0
        %656 = vmatpush1.msra.mxu0 0.0
        %657 = vmatprep.subr.mxu0 0.0
        %658 = vmatpush1.msra.mxu0 0.0
        %659 = vmatprep.mubr.f32.mxu0 0.0
        %660 = vmatmul.mubr.f32.gmra.mrb[0].mxu0 %v397
        %v661 = vpop.f32.mrb[0].mxu0
        %v662 = vadd.f32 0.0, %v661
        %v663 = vpop.f32.mrb[0].mxu0
        %664 = vmatprep.mubr.f32.mxu0 0.0
        %665 = vmatmul.mubr.f32.gmra.mrb[0].mxu0 %v400
        %v666 = vpop.f32.mrb[0].mxu0
        %v667 = vadd.f32 0.0, %v666
        %v668 = vpop.f32.mrb[0].mxu0
        %669 = vdwg.mxu0
        %v670 = vlog2.pop %v662
        %v671 = vmul.f32 %v670, 0.6931472
        %v672 = vlog2.pop %v667
        %v673 = vmul.f32 %v672, 0.6931472
        %v674 = vadd.f32 %v671, %v588
        %v675 = vadd.f32 %v673, %v588
        %v676 = vadd.f32 %v674, %v263
        %v677 = vadd.f32 %v675, %v266
        %v678 = vadd.f32 %v676, %v232
        %v679 = vadd.f32 %v677, %v233
        %v680 = vmul.f32 %v234, %v250
        %v681 = vmul.f32 %v235, %v251
        %v682 = vadd.f32 %v680, %v681
        %v683 = vrot.slane %v682, 4
        %v684 = vadd.f32 %v682, %v683
        %v685 = vrot.slane %v684, 2
        %v686 = vadd.f32 %v684, %v685
        %v687 = vrot.slane %v686, 1
        %v688 = vadd.f32 %v686, %v687
        %v689 = vadd.f32 %v581, %v688
        %690 = vmatprep.subr.mxu0 0.0
        %691 = vmatpush1.msra.mxu0 %v248
        %692 = vmatprep.subr.mxu0 0.0
        %693 = vmatpush1.msra.mxu0 %v249
        %694 = vmatprep.subr.mxu0 0.0
        %695 = vmatpush1.msra.mxu0 0.0
        %696 = vmatprep.subr.mxu0 0.0
        %697 = vmatpush1.msra.mxu0 0.0
        %698 = vmatprep.subr.mxu0 0.0
        %699 = vmatpush1.msra.mxu0 0.0
        %700 = vmatprep.subr.mxu0 0.0
        %701 = vmatpush1.msra.mxu0 0.0
        %702 = vmatprep.subr.mxu0 0.0
        %703 = vmatpush1.msra.mxu0 0.0
        %704 = vmatprep.subr.mxu0 0.0
        %705 = vmatpush1.msra.mxu0 0.0
        %706 = vmatprep.subr.mxu0 0.0
        %707 = vmatpush1.msra.mxu0 0.0
        %708 = vmatprep.subr.mxu0 0.0
        %709 = vmatpush1.msra.mxu0 0.0
        %710 = vmatprep.subr.mxu0 0.0
        %711 = vmatpush1.msra.mxu0 0.0
        %712 = vmatprep.subr.mxu0 0.0
        %713 = vmatpush1.msra.mxu0 0.0
        %714 = vmatprep.subr.mxu0 0.0
        %715 = vmatpush1.msra.mxu0 0.0
        %716 = vmatprep.subr.mxu0 0.0
        %717 = vmatpush1.msra.mxu0 0.0
        %718 = vmatprep.subr.mxu0 0.0
        %719 = vmatpush1.msra.mxu0 0.0
        %720 = vmatprep.subr.mxu0 0.0
        %721 = vmatpush1.msra.mxu0 0.0
        %722 = vmatprep.subr.mxu0 0.0
        %723 = vmatpush1.msra.mxu0 0.0
        %724 = vmatprep.subr.mxu0 0.0
        %725 = vmatpush1.msra.mxu0 0.0
        %726 = vmatprep.subr.mxu0 0.0
        %727 = vmatpush1.msra.mxu0 0.0
        %728 = vmatprep.subr.mxu0 0.0
        %729 = vmatpush1.msra.mxu0 0.0
        %730 = vmatprep.subr.mxu0 0.0
        %731 = vmatpush1.msra.mxu0 0.0
        %732 = vmatprep.subr.mxu0 0.0
        %733 = vmatpush1.msra.mxu0 0.0
        %734 = vmatprep.subr.mxu0 0.0
        %735 = vmatpush1.msra.mxu0 0.0
        %736 = vmatprep.subr.mxu0 0.0
        %737 = vmatpush1.msra.mxu0 0.0
        %738 = vmatprep.subr.mxu0 0.0
        %739 = vmatpush1.msra.mxu0 0.0
        %740 = vmatprep.subr.mxu0 0.0
        %741 = vmatpush1.msra.mxu0 0.0
        %742 = vmatprep.subr.mxu0 0.0
        %743 = vmatpush1.msra.mxu0 0.0
        %744 = vmatprep.subr.mxu0 0.0
        %745 = vmatpush1.msra.mxu0 0.0
        %746 = vmatprep.subr.mxu0 0.0
        %747 = vmatpush1.msra.mxu0 0.0
        %748 = vmatprep.subr.mxu0 0.0
        %749 = vmatpush1.msra.mxu0 0.0
        %750 = vmatprep.subr.mxu0 0.0
        %751 = vmatpush1.msra.mxu0 0.0
        %752 = vmatprep.subr.mxu0 0.0
        %753 = vmatpush1.msra.mxu0 0.0
        %754 = vmatprep.mubr.f32.mxu0 0.0
        %755 = vmatmul.mubr.f32.gmra.mrb[0].mxu0 %v293
        %v756 = vpop.f32.mrb[0].mxu0
        %v757 = vadd.f32 0.0, %v756
        %v758 = vpop.f32.mrb[0].mxu0
        %759 = vmatprep.mubr.f32.mxu0 0.0
        %760 = vmatmul.mubr.f32.gmra.mrb[0].mxu0 %v296
        %v761 = vpop.f32.mrb[0].mxu0
        %v762 = vadd.f32 0.0, %v761
        %v763 = vpop.f32.mrb[0].mxu0
        %764 = vdwg.mxu0
        %v765 = vmul.f32 %v250, %v757
        %v766 = vmul.f32 %v251, %v762
        %v767 = vadd.f32 %v765, %v766
        %v768 = vrot.slane %v767, 4
        %v769 = vadd.f32 %v767, %v768
        %v770 = vrot.slane %v769, 2
        %v771 = vadd.f32 %v769, %v770
        %v772 = vrot.slane %v771, 1
        %v773 = vadd.f32 %v771, %v772
        %v774 = vadd.f32 %v689, %v773
        %v775 = vmax.f32 %v678, %v679
        %v776 = vrot.slane %v775, 4
        %v777 = vmax.f32 %v775, %v776
        %v778 = vrot.slane %v777, 2
        %v779 = vmax.f32 %v777, %v778
        %v780 = vrot.slane %v779, 1
        %v781 = vmax.f32 %v779, %v780
        %v782 = vsub.f32 %v678, %v781
        %v783 = vsub.f32 %v679, %v781
        %v784 = vmul.f32 %v782, 1.442695
        %v785 = vpow.pop %v784
        %v786 = vmul.f32 %v783, 1.442695
        %v787 = vpow.pop %v786
        %788 = vmatprep.subr.mxu0 0.0
        %789 = vmatpush1.msra.mxu0 %v785
        %790 = vmatprep.subr.mxu0 0.0
        %791 = vmatpush1.msra.mxu0 %v787
        %792 = vmatprep.subr.mxu0 0.0
        %793 = vmatpush1.msra.mxu0 0.0
        %794 = vmatprep.subr.mxu0 0.0
        %795 = vmatpush1.msra.mxu0 0.0
        %796 = vmatprep.subr.mxu0 0.0
        %797 = vmatpush1.msra.mxu0 0.0
        %798 = vmatprep.subr.mxu0 0.0
        %799 = vmatpush1.msra.mxu0 0.0
        %800 = vmatprep.subr.mxu0 0.0
        %801 = vmatpush1.msra.mxu0 0.0
        %802 = vmatprep.subr.mxu0 0.0
        %803 = vmatpush1.msra.mxu0 0.0
        %804 = vmatprep.subr.mxu0 0.0
        %805 = vmatpush1.msra.mxu0 0.0
        %806 = vmatprep.subr.mxu0 0.0
        %807 = vmatpush1.msra.mxu0 0.0
        %808 = vmatprep.subr.mxu0 0.0
        %809 = vmatpush1.msra.mxu0 0.0
        %810 = vmatprep.subr.mxu0 0.0
        %811 = vmatpush1.msra.mxu0 0.0
        %812 = vmatprep.subr.mxu0 0.0
        %813 = vmatpush1.msra.mxu0 0.0
        %814 = vmatprep.subr.mxu0 0.0
        %815 = vmatpush1.msra.mxu0 0.0
        %816 = vmatprep.subr.mxu0 0.0
        %817 = vmatpush1.msra.mxu0 0.0
        %818 = vmatprep.subr.mxu0 0.0
        %819 = vmatpush1.msra.mxu0 0.0
        %820 = vmatprep.subr.mxu0 0.0
        %821 = vmatpush1.msra.mxu0 0.0
        %822 = vmatprep.subr.mxu0 0.0
        %823 = vmatpush1.msra.mxu0 0.0
        %824 = vmatprep.subr.mxu0 0.0
        %825 = vmatpush1.msra.mxu0 0.0
        %826 = vmatprep.subr.mxu0 0.0
        %827 = vmatpush1.msra.mxu0 0.0
        %828 = vmatprep.subr.mxu0 0.0
        %829 = vmatpush1.msra.mxu0 0.0
        %830 = vmatprep.subr.mxu0 0.0
        %831 = vmatpush1.msra.mxu0 0.0
        %832 = vmatprep.subr.mxu0 0.0
        %833 = vmatpush1.msra.mxu0 0.0
        %834 = vmatprep.subr.mxu0 0.0
        %835 = vmatpush1.msra.mxu0 0.0
        %836 = vmatprep.subr.mxu0 0.0
        %837 = vmatpush1.msra.mxu0 0.0
        %838 = vmatprep.subr.mxu0 0.0
        %839 = vmatpush1.msra.mxu0 0.0
        %840 = vmatprep.subr.mxu0 0.0
        %841 = vmatpush1.msra.mxu0 0.0
        %842 = vmatprep.subr.mxu0 0.0
        %843 = vmatpush1.msra.mxu0 0.0
        %844 = vmatprep.subr.mxu0 0.0
        %845 = vmatpush1.msra.mxu0 0.0
        %846 = vmatprep.subr.mxu0 0.0
        %847 = vmatpush1.msra.mxu0 0.0
        %848 = vmatprep.subr.mxu0 0.0
        %849 = vmatpush1.msra.mxu0 0.0
        %850 = vmatprep.subr.mxu0 0.0
        %851 = vmatpush1.msra.mxu0 0.0
        %852 = vmatprep.mubr.f32.mxu0 0.0
        %853 = vmatmul.mubr.f32.gmra.mrb[0].mxu0 %v397
        %v854 = vpop.f32.mrb[0].mxu0
        %v855 = vadd.f32 0.0, %v854
        %v856 = vpop.f32.mrb[0].mxu0
        %857 = vmatprep.mubr.f32.mxu0 0.0
        %858 = vmatmul.mubr.f32.gmra.mrb[0].mxu0 %v400
        %v859 = vpop.f32.mrb[0].mxu0
        %v860 = vadd.f32 0.0, %v859
        %v861 = vpop.f32.mrb[0].mxu0
        %862 = vdwg.mxu0
        %v863 = vlog2.pop %v855
        %v864 = vmul.f32 %v863, 0.6931472
        %v865 = vlog2.pop %v860
        %v866 = vmul.f32 %v865, 0.6931472
        %v867 = vadd.f32 %v864, %v781
        %v868 = vadd.f32 %v866, %v781
        %v869 = vadd.f32 %v867, %v263
        %v870 = vadd.f32 %v868, %v266
        %v871 = vadd.f32 %v869, %v234
        %v872 = vadd.f32 %v870, %v235
        %v873 = vmul.f32 %v236, %v252
        %v874 = vmul.f32 %v237, %v253
        %v875 = vadd.f32 %v873, %v874
        %v876 = vrot.slane %v875, 4
        %v877 = vadd.f32 %v875, %v876
        %v878 = vrot.slane %v877, 2
        %v879 = vadd.f32 %v877, %v878
        %v880 = vrot.slane %v879, 1
        %v881 = vadd.f32 %v879, %v880
        %v882 = vadd.f32 %v774, %v881
        %883 = vmatprep.subr.mxu0 0.0
        %884 = vmatpush1.msra.mxu0 %v250
        %885 = vmatprep.subr.mxu0 0.0
        %886 = vmatpush1.msra.mxu0 %v251
        %887 = vmatprep.subr.mxu0 0.0
        %888 = vmatpush1.msra.mxu0 0.0
        %889 = vmatprep.subr.mxu0 0.0
        %890 = vmatpush1.msra.mxu0 0.0
        %891 = vmatprep.subr.mxu0 0.0
        %892 = vmatpush1.msra.mxu0 0.0
        %893 = vmatprep.subr.mxu0 0.0
        %894 = vmatpush1.msra.mxu0 0.0
        %895 = vmatprep.subr.mxu0 0.0
        %896 = vmatpush1.msra.mxu0 0.0
        %897 = vmatprep.subr.mxu0 0.0
        %898 = vmatpush1.msra.mxu0 0.0
        %899 = vmatprep.subr.mxu0 0.0
        %900 = vmatpush1.msra.mxu0 0.0
        %901 = vmatprep.subr.mxu0 0.0
        %902 = vmatpush1.msra.mxu0 0.0
        %903 = vmatprep.subr.mxu0 0.0
        %904 = vmatpush1.msra.mxu0 0.0
        %905 = vmatprep.subr.mxu0 0.0
        %906 = vmatpush1.msra.mxu0 0.0
        %907 = vmatprep.subr.mxu0 0.0
        %908 = vmatpush1.msra.mxu0 0.0
        %909 = vmatprep.subr.mxu0 0.0
        %910 = vmatpush1.msra.mxu0 0.0
        %911 = vmatprep.subr.mxu0 0.0
        %912 = vmatpush1.msra.mxu0 0.0
        %913 = vmatprep.subr.mxu0 0.0
        %914 = vmatpush1.msra.mxu0 0.0
        %915 = vmatprep.subr.mxu0 0.0
        %916 = vmatpush1.msra.mxu0 0.0
        %917 = vmatprep.subr.mxu0 0.0
        %918 = vmatpush1.msra.mxu0 0.0
        %919 = vmatprep.subr.mxu0 0.0
        %920 = vmatpush1.msra.mxu0 0.0
        %921 = vmatprep.subr.mxu0 0.0
        %922 = vmatpush1.msra.mxu0 0.0
        %923 = vmatprep.subr.mxu0 0.0
        %924 = vmatpush1.msra.mxu0 0.0
        %925 = vmatprep.subr.mxu0 0.0
        %926 = vmatpush1.msra.mxu0 0.0
        %927 = vmatprep.subr.mxu0 0.0
        %928 = vmatpush1.msra.mxu0 0.0
        %929 = vmatprep.subr.mxu0 0.0
        %930 = vmatpush1.msra.mxu0 0.0
        %931 = vmatprep.subr.mxu0 0.0
        %932 = vmatpush1.msra.mxu0 0.0
        %933 = vmatprep.subr.mxu0 0.0
        %934 = vmatpush1.msra.mxu0 0.0
        %935 = vmatprep.subr.mxu0 0.0
        %936 = vmatpush1.msra.mxu0 0.0
        %937 = vmatprep.subr.mxu0 0.0
        %938 = vmatpush1.msra.mxu0 0.0
        %939 = vmatprep.subr.mxu0 0.0
        %940 = vmatpush1.msra.mxu0 0.0
        %941 = vmatprep.subr.mxu0 0.0
        %942 = vmatpush1.msra.mxu0 0.0
        %943 = vmatprep.subr.mxu0 0.0
        %944 = vmatpush1.msra.mxu0 0.0
        %945 = vmatprep.subr.mxu0 0.0
        %946 = vmatpush1.msra.mxu0 0.0
        %947 = vmatprep.mubr.f32.mxu0 0.0
        %948 = vmatmul.mubr.f32.gmra.mrb[0].mxu0 %v293
        %v949 = vpop.f32.mrb[0].mxu0
        %v950 = vadd.f32 0.0, %v949
        %v951 = vpop.f32.mrb[0].mxu0
        %952 = vmatprep.mubr.f32.mxu0 0.0
        %953 = vmatmul.mubr.f32.gmra.mrb[0].mxu0 %v296
        %v954 = vpop.f32.mrb[0].mxu0
        %v955 = vadd.f32 0.0, %v954
        %v956 = vpop.f32.mrb[0].mxu0
        %957 = vdwg.mxu0
        %v958 = vmul.f32 %v252, %v950
        %v959 = vmul.f32 %v253, %v955
        %v960 = vadd.f32 %v958, %v959
        %v961 = vrot.slane %v960, 4
        %v962 = vadd.f32 %v960, %v961
        %v963 = vrot.slane %v962, 2
        %v964 = vadd.f32 %v962, %v963
        %v965 = vrot.slane %v964, 1
        %v966 = vadd.f32 %v964, %v965
        %v967 = vadd.f32 %v882, %v966
        %v968 = vmax.f32 %v871, %v872
        %v969 = vrot.slane %v968, 4
        %v970 = vmax.f32 %v968, %v969
        %v971 = vrot.slane %v970, 2
        %v972 = vmax.f32 %v970, %v971
        %v973 = vrot.slane %v972, 1
        %v974 = vmax.f32 %v972, %v973
        %v975 = vsub.f32 %v871, %v974
        %v976 = vsub.f32 %v872, %v974
        %v977 = vmul.f32 %v975, 1.442695
        %v978 = vpow.pop %v977
        %v979 = vmul.f32 %v976, 1.442695
        %v980 = vpow.pop %v979
        %981 = vmatprep.subr.mxu0 0.0
        %982 = vmatpush1.msra.mxu0 %v978
        %983 = vmatprep.subr.mxu0 0.0
        %984 = vmatpush1.msra.mxu0 %v980
        %985 = vmatprep.subr.mxu0 0.0
        %986 = vmatpush1.msra.mxu0 0.0
        %987 = vmatprep.subr.mxu0 0.0
        %988 = vmatpush1.msra.mxu0 0.0
        %989 = vmatprep.subr.mxu0 0.0
        %990 = vmatpush1.msra.mxu0 0.0
        %991 = vmatprep.subr.mxu0 0.0
        %992 = vmatpush1.msra.mxu0 0.0
        %993 = vmatprep.subr.mxu0 0.0
        %994 = vmatpush1.msra.mxu0 0.0
        %995 = vmatprep.subr.mxu0 0.0
        %996 = vmatpush1.msra.mxu0 0.0
        %997 = vmatprep.subr.mxu0 0.0
        %998 = vmatpush1.msra.mxu0 0.0
        %999 = vmatprep.subr.mxu0 0.0
        %1000 = vmatpush1.msra.mxu0 0.0
        %1001 = vmatprep.subr.mxu0 0.0
        %1002 = vmatpush1.msra.mxu0 0.0
        %1003 = vmatprep.subr.mxu0 0.0
        %1004 = vmatpush1.msra.mxu0 0.0
        %1005 = vmatprep.subr.mxu0 0.0
        %1006 = vmatpush1.msra.mxu0 0.0
        %1007 = vmatprep.subr.mxu0 0.0
        %1008 = vmatpush1.msra.mxu0 0.0
        %1009 = vmatprep.subr.mxu0 0.0
        %1010 = vmatpush1.msra.mxu0 0.0
        %1011 = vmatprep.subr.mxu0 0.0
        %1012 = vmatpush1.msra.mxu0 0.0
        %1013 = vmatprep.subr.mxu0 0.0
        %1014 = vmatpush1.msra.mxu0 0.0
        %1015 = vmatprep.subr.mxu0 0.0
        %1016 = vmatpush1.msra.mxu0 0.0
        %1017 = vmatprep.subr.mxu0 0.0
        %1018 = vmatpush1.msra.mxu0 0.0
        %1019 = vmatprep.subr.mxu0 0.0
        %1020 = vmatpush1.msra.mxu0 0.0
        %1021 = vmatprep.subr.mxu0 0.0
        %1022 = vmatpush1.msra.mxu0 0.0
        %1023 = vmatprep.subr.mxu0 0.0
        %1024 = vmatpush1.msra.mxu0 0.0
        %1025 = vmatprep.subr.mxu0 0.0
        %1026 = vmatpush1.msra.mxu0 0.0
        %1027 = vmatprep.subr.mxu0 0.0
        %1028 = vmatpush1.msra.mxu0 0.0
        %1029 = vmatprep.subr.mxu0 0.0
        %1030 = vmatpush1.msra.mxu0 0.0
        %1031 = vmatprep.subr.mxu0 0.0
        %1032 = vmatpush1.msra.mxu0 0.0
        %1033 = vmatprep.subr.mxu0 0.0
        %1034 = vmatpush1.msra.mxu0 0.0
        %1035 = vmatprep.subr.mxu0 0.0
        %1036 = vmatpush1.msra.mxu0 0.0
        %1037 = vmatprep.subr.mxu0 0.0
        %1038 = vmatpush1.msra.mxu0 0.0
        %1039 = vmatprep.subr.mxu0 0.0
        %1040 = vmatpush1.msra.mxu0 0.0
        %1041 = vmatprep.subr.mxu0 0.0
        %1042 = vmatpush1.msra.mxu0 0.0
        %1043 = vmatprep.subr.mxu0 0.0
        %1044 = vmatpush1.msra.mxu0 0.0
        %1045 = vmatprep.mubr.f32.mxu0 0.0
        %1046 = vmatmul.mubr.f32.gmra.mrb[0].mxu0 %v397
        %v1047 = vpop.f32.mrb[0].mxu0
        %v1048 = vadd.f32 0.0, %v1047
        %v1049 = vpop.f32.mrb[0].mxu0
        %1050 = vmatprep.mubr.f32.mxu0 0.0
        %1051 = vmatmul.mubr.f32.gmra.mrb[0].mxu0 %v400
        %v1052 = vpop.f32.mrb[0].mxu0
        %v1053 = vadd.f32 0.0, %v1052
        %v1054 = vpop.f32.mrb[0].mxu0
        %1055 = vdwg.mxu0
        %v1056 = vlog2.pop %v1048
        %v1057 = vmul.f32 %v1056, 0.6931472
        %v1058 = vlog2.pop %v1053
        %v1059 = vmul.f32 %v1058, 0.6931472
        %v1060 = vadd.f32 %v1057, %v974
        %v1061 = vadd.f32 %v1059, %v974
        %v1062 = vadd.f32 %v1060, %v263
        %v1063 = vadd.f32 %v1061, %v266
        %v1064 = vadd.f32 %v1062, %v236
        %v1065 = vadd.f32 %v1063, %v237
        %v1066 = vmul.f32 %v238, %v254
        %v1067 = vmul.f32 %v239, %v255
        %v1068 = vadd.f32 %v1066, %v1067
        %v1069 = vrot.slane %v1068, 4
        %v1070 = vadd.f32 %v1068, %v1069
        %v1071 = vrot.slane %v1070, 2
        %v1072 = vadd.f32 %v1070, %v1071
        %v1073 = vrot.slane %v1072, 1
        %v1074 = vadd.f32 %v1072, %v1073
        %v1075 = vadd.f32 %v967, %v1074
        %1076 = vmatprep.subr.mxu0 0.0
        %1077 = vmatpush1.msra.mxu0 %v252
        %1078 = vmatprep.subr.mxu0 0.0
        %1079 = vmatpush1.msra.mxu0 %v253
        %1080 = vmatprep.subr.mxu0 0.0
        %1081 = vmatpush1.msra.mxu0 0.0
        %1082 = vmatprep.subr.mxu0 0.0
        %1083 = vmatpush1.msra.mxu0 0.0
        %1084 = vmatprep.subr.mxu0 0.0
        %1085 = vmatpush1.msra.mxu0 0.0
        %1086 = vmatprep.subr.mxu0 0.0
        %1087 = vmatpush1.msra.mxu0 0.0
        %1088 = vmatprep.subr.mxu0 0.0
        %1089 = vmatpush1.msra.mxu0 0.0
        %1090 = vmatprep.subr.mxu0 0.0
        %1091 = vmatpush1.msra.mxu0 0.0
        %1092 = vmatprep.subr.mxu0 0.0
        %1093 = vmatpush1.msra.mxu0 0.0
        %1094 = vmatprep.subr.mxu0 0.0
        %1095 = vmatpush1.msra.mxu0 0.0
        %1096 = vmatprep.subr.mxu0 0.0
        %1097 = vmatpush1.msra.mxu0 0.0
        %1098 = vmatprep.subr.mxu0 0.0
        %1099 = vmatpush1.msra.mxu0 0.0
        %1100 = vmatprep.subr.mxu0 0.0
        %1101 = vmatpush1.msra.mxu0 0.0
        %1102 = vmatprep.subr.mxu0 0.0
        %1103 = vmatpush1.msra.mxu0 0.0
        %1104 = vmatprep.subr.mxu0 0.0
        %1105 = vmatpush1.msra.mxu0 0.0
        %1106 = vmatprep.subr.mxu0 0.0
        %1107 = vmatpush1.msra.mxu0 0.0
        %1108 = vmatprep.subr.mxu0 0.0
        %1109 = vmatpush1.msra.mxu0 0.0
        %1110 = vmatprep.subr.mxu0 0.0
        %1111 = vmatpush1.msra.mxu0 0.0
        %1112 = vmatprep.subr.mxu0 0.0
        %1113 = vmatpush1.msra.mxu0 0.0
        %1114 = vmatprep.subr.mxu0 0.0
        %1115 = vmatpush1.msra.mxu0 0.0
        %1116 = vmatprep.subr.mxu0 0.0
        %1117 = vmatpush1.msra.mxu0 0.0
        %1118 = vmatprep.subr.mxu0 0.0
        %1119 = vmatpush1.msra.mxu0 0.0
        %1120 = vmatprep.subr.mxu0 0.0
        %1121 = vmatpush1.msra.mxu0 0.0
        %1122 = vmatprep.subr.mxu0 0.0
        %1123 = vmatpush1.msra.mxu0 0.0
        %1124 = vmatprep.subr.mxu0 0.0
        %1125 = vmatpush1.msra.mxu0 0.0
        %1126 = vmatprep.subr.mxu0 0.0
        %1127 = vmatpush1.msra.mxu0 0.0
        %1128 = vmatprep.subr.mxu0 0.0
        %1129 = vmatpush1.msra.mxu0 0.0
        %1130 = vmatprep.subr.mxu0 0.0
        %1131 = vmatpush1.msra.mxu0 0.0
        %1132 = vmatprep.subr.mxu0 0.0
        %1133 = vmatpush1.msra.mxu0 0.0
        %1134 = vmatprep.subr.mxu0 0.0
        %1135 = vmatpush1.msra.mxu0 0.0
        %1136 = vmatprep.subr.mxu0 0.0
        %1137 = vmatpush1.msra.mxu0 0.0
        %1138 = vmatprep.subr.mxu0 0.0
        %1139 = vmatpush1.msra.mxu0 0.0
        %1140 = vmatprep.mubr.f32.mxu0 0.0
        %1141 = vmatmul.mubr.f32.gmra.mrb[0].mxu0 %v293
        %v1142 = vpop.f32.mrb[0].mxu0
        %v1143 = vadd.f32 0.0, %v1142
        %v1144 = vpop.f32.mrb[0].mxu0
        %1145 = vmatprep.mubr.f32.mxu0 0.0
        %1146 = vmatmul.mubr.f32.gmra.mrb[0].mxu0 %v296
        %v1147 = vpop.f32.mrb[0].mxu0
        %v1148 = vadd.f32 0.0, %v1147
        %v1149 = vpop.f32.mrb[0].mxu0
        %1150 = vdwg.mxu0
        %v1151 = vmul.f32 %v254, %v1143
        %v1152 = vmul.f32 %v255, %v1148
        %v1153 = vadd.f32 %v1151, %v1152
        %v1154 = vrot.slane %v1153, 4
        %v1155 = vadd.f32 %v1153, %v1154
        %v1156 = vrot.slane %v1155, 2
        %v1157 = vadd.f32 %v1155, %v1156
        %v1158 = vrot.slane %v1157, 1
        %v1159 = vadd.f32 %v1157, %v1158
        %v1160 = vadd.f32 %v1075, %v1159
        %v1161 = vmax.f32 %v1064, %v1065
        %v1162 = vrot.slane %v1161, 4
        %v1163 = vmax.f32 %v1161, %v1162
        %v1164 = vrot.slane %v1163, 2
        %v1165 = vmax.f32 %v1163, %v1164
        %v1166 = vrot.slane %v1165, 1
        %v1167 = vmax.f32 %v1165, %v1166
        %v1168 = vsub.f32 %v1064, %v1167
        %v1169 = vsub.f32 %v1065, %v1167
        %v1170 = vmul.f32 %v1168, 1.442695
        %v1171 = vpow.pop %v1170
        %v1172 = vmul.f32 %v1169, 1.442695
        %v1173 = vpow.pop %v1172
        %1174 = vmatprep.subr.mxu0 0.0
        %1175 = vmatpush1.msra.mxu0 %v1171
        %1176 = vmatprep.subr.mxu0 0.0
        %1177 = vmatpush1.msra.mxu0 %v1173
        %1178 = vmatprep.subr.mxu0 0.0
        %1179 = vmatpush1.msra.mxu0 0.0
        %1180 = vmatprep.subr.mxu0 0.0
        %1181 = vmatpush1.msra.mxu0 0.0
        %1182 = vmatprep.subr.mxu0 0.0
        %1183 = vmatpush1.msra.mxu0 0.0
        %1184 = vmatprep.subr.mxu0 0.0
        %1185 = vmatpush1.msra.mxu0 0.0
        %1186 = vmatprep.subr.mxu0 0.0
        %1187 = vmatpush1.msra.mxu0 0.0
        %1188 = vmatprep.subr.mxu0 0.0
        %1189 = vmatpush1.msra.mxu0 0.0
        %1190 = vmatprep.subr.mxu0 0.0
        %1191 = vmatpush1.msra.mxu0 0.0
        %1192 = vmatprep.subr.mxu0 0.0
        %1193 = vmatpush1.msra.mxu0 0.0
        %1194 = vmatprep.subr.mxu0 0.0
        %1195 = vmatpush1.msra.mxu0 0.0
        %1196 = vmatprep.subr.mxu0 0.0
        %1197 = vmatpush1.msra.mxu0 0.0
        %1198 = vmatprep.subr.mxu0 0.0
        %1199 = vmatpush1.msra.mxu0 0.0
        %1200 = vmatprep.subr.mxu0 0.0
        %1201 = vmatpush1.msra.mxu0 0.0
        %1202 = vmatprep.subr.mxu0 0.0
        %1203 = vmatpush1.msra.mxu0 0.0
        %1204 = vmatprep.subr.mxu0 0.0
        %1205 = vmatpush1.msra.mxu0 0.0
        %1206 = vmatprep.subr.mxu0 0.0
        %1207 = vmatpush1.msra.mxu0 0.0
        %1208 = vmatprep.subr.mxu0 0.0
        %1209 = vmatpush1.msra.mxu0 0.0
        %1210 = vmatprep.subr.mxu0 0.0
        %1211 = vmatpush1.msra.mxu0 0.0
        %1212 = vmatprep.subr.mxu0 0.0
        %1213 = vmatpush1.msra.mxu0 0.0
        %1214 = vmatprep.subr.mxu0 0.0
        %1215 = vmatpush1.msra.mxu0 0.0
        %1216 = vmatprep.subr.mxu0 0.0
        %1217 = vmatpush1.msra.mxu0 0.0
        %1218 = vmatprep.subr.mxu0 0.0
        %1219 = vmatpush1.msra.mxu0 0.0
        %1220 = vmatprep.subr.mxu0 0.0
        %1221 = vmatpush1.msra.mxu0 0.0
        %1222 = vmatprep.subr.mxu0 0.0
        %1223 = vmatpush1.msra.mxu0 0.0
        %1224 = vmatprep.subr.mxu0 0.0
        %1225 = vmatpush1.msra.mxu0 0.0
        %1226 = vmatprep.subr.mxu0 0.0
        %1227 = vmatpush1.msra.mxu0 0.0
        %1228 = vmatprep.subr.mxu0 0.0
        %1229 = vmatpush1.msra.mxu0 0.0
        %1230 = vmatprep.subr.mxu0 0.0
        %1231 = vmatpush1.msra.mxu0 0.0
        %1232 = vmatprep.subr.mxu0 0.0
        %1233 = vmatpush1.msra.mxu0 0.0
        %1234 = vmatprep.subr.mxu0 0.0
        %1235 = vmatpush1.msra.mxu0 0.0
        %1236 = vmatprep.subr.mxu0 0.0
        %1237 = vmatpush1.msra.mxu0 0.0
        %1238 = vmatprep.mubr.f32.mxu0 0.0
        %1239 = vmatmul.mubr.f32.gmra.mrb[0].mxu0 %v397
        %v1240 = vpop.f32.mrb[0].mxu0
        %v1241 = vadd.f32 0.0, %v1240
        %v1242 = vpop.f32.mrb[0].mxu0
        %1243 = vmatprep.mubr.f32.mxu0 0.0
        %1244 = vmatmul.mubr.f32.gmra.mrb[0].mxu0 %v400
        %v1245 = vpop.f32.mrb[0].mxu0
        %v1246 = vadd.f32 0.0, %v1245
        %v1247 = vpop.f32.mrb[0].mxu0
        %1248 = vdwg.mxu0
        %v1249 = vlog2.pop %v1241
        %v1250 = vmul.f32 %v1249, 0.6931472
        %v1251 = vlog2.pop %v1246
        %v1252 = vmul.f32 %v1251, 0.6931472
        %v1253 = vadd.f32 %v1250, %v1167
        %v1254 = vadd.f32 %v1252, %v1167
        %v1255 = vadd.f32 %v1253, %v263
        %v1256 = vadd.f32 %v1254, %v266
        %v1257 = vadd.f32 %v1255, %v238
        %v1258 = vadd.f32 %v1256, %v239
        %v1259 = vmul.f32 %v240, %v256
        %v1260 = vmul.f32 %v241, %v257
        %v1261 = vadd.f32 %v1259, %v1260
        %v1262 = vrot.slane %v1261, 4
        %v1263 = vadd.f32 %v1261, %v1262
        %v1264 = vrot.slane %v1263, 2
        %v1265 = vadd.f32 %v1263, %v1264
        %v1266 = vrot.slane %v1265, 1
        %v1267 = vadd.f32 %v1265, %v1266
        %v1268 = vadd.f32 %v1160, %v1267
        %1269 = vmatprep.subr.mxu0 0.0
        %1270 = vmatpush1.msra.mxu0 %v254
        %1271 = vmatprep.subr.mxu0 0.0
        %1272 = vmatpush1.msra.mxu0 %v255
        %1273 = vmatprep.subr.mxu0 0.0
        %1274 = vmatpush1.msra.mxu0 0.0
        %1275 = vmatprep.subr.mxu0 0.0
        %1276 = vmatpush1.msra.mxu0 0.0
        %1277 = vmatprep.subr.mxu0 0.0
        %1278 = vmatpush1.msra.mxu0 0.0
        %1279 = vmatprep.subr.mxu0 0.0
        %1280 = vmatpush1.msra.mxu0 0.0
        %1281 = vmatprep.subr.mxu0 0.0
        %1282 = vmatpush1.msra.mxu0 0.0
        %1283 = vmatprep.subr.mxu0 0.0
        %1284 = vmatpush1.msra.mxu0 0.0
        %1285 = vmatprep.subr.mxu0 0.0
        %1286 = vmatpush1.msra.mxu0 0.0
        %1287 = vmatprep.subr.mxu0 0.0
        %1288 = vmatpush1.msra.mxu0 0.0
        %1289 = vmatprep.subr.mxu0 0.0
        %1290 = vmatpush1.msra.mxu0 0.0
        %1291 = vmatprep.subr.mxu0 0.0
        %1292 = vmatpush1.msra.mxu0 0.0
        %1293 = vmatprep.subr.mxu0 0.0
        %1294 = vmatpush1.msra.mxu0 0.0
        %1295 = vmatprep.subr.mxu0 0.0
        %1296 = vmatpush1.msra.mxu0 0.0
        %1297 = vmatprep.subr.mxu0 0.0
        %1298 = vmatpush1.msra.mxu0 0.0
        %1299 = vmatprep.subr.mxu0 0.0
        %1300 = vmatpush1.msra.mxu0 0.0
        %1301 = vmatprep.subr.mxu0 0.0
        %1302 = vmatpush1.msra.mxu0 0.0
        %1303 = vmatprep.subr.mxu0 0.0
        %1304 = vmatpush1.msra.mxu0 0.0
        %1305 = vmatprep.subr.mxu0 0.0
        %1306 = vmatpush1.msra.mxu0 0.0
        %1307 = vmatprep.subr.mxu0 0.0
        %1308 = vmatpush1.msra.mxu0 0.0
        %1309 = vmatprep.subr.mxu0 0.0
        %1310 = vmatpush1.msra.mxu0 0.0
        %1311 = vmatprep.subr.mxu0 0.0
        %1312 = vmatpush1.msra.mxu0 0.0
        %1313 = vmatprep.subr.mxu0 0.0
        %1314 = vmatpush1.msra.mxu0 0.0
        %1315 = vmatprep.subr.mxu0 0.0
        %1316 = vmatpush1.msra.mxu0 0.0
        %1317 = vmatprep.subr.mxu0 0.0
        %1318 = vmatpush1.msra.mxu0 0.0
        %1319 = vmatprep.subr.mxu0 0.0
        %1320 = vmatpush1.msra.mxu0 0.0
        %1321 = vmatprep.subr.mxu0 0.0
        %1322 = vmatpush1.msra.mxu0 0.0
        %1323 = vmatprep.subr.mxu0 0.0
        %1324 = vmatpush1.msra.mxu0 0.0
        %1325 = vmatprep.subr.mxu0 0.0
        %1326 = vmatpush1.msra.mxu0 0.0
        %1327 = vmatprep.subr.mxu0 0.0
        %1328 = vmatpush1.msra.mxu0 0.0
        %1329 = vmatprep.subr.mxu0 0.0
        %1330 = vmatpush1.msra.mxu0 0.0
        %1331 = vmatprep.subr.mxu0 0.0
        %1332 = vmatpush1.msra.mxu0 0.0
        %1333 = vmatprep.mubr.f32.mxu0 0.0
        %1334 = vmatmul.mubr.f32.gmra.mrb[0].mxu0 %v293
        %v1335 = vpop.f32.mrb[0].mxu0
        %v1336 = vadd.f32 0.0, %v1335
        %v1337 = vpop.f32.mrb[0].mxu0
        %1338 = vmatprep.mubr.f32.mxu0 0.0
        %1339 = vmatmul.mubr.f32.gmra.mrb[0].mxu0 %v296
        %v1340 = vpop.f32.mrb[0].mxu0
        %v1341 = vadd.f32 0.0, %v1340
        %v1342 = vpop.f32.mrb[0].mxu0
        %1343 = vdwg.mxu0
        %v1344 = vmul.f32 %v256, %v1336
        %v1345 = vmul.f32 %v257, %v1341
        %v1346 = vadd.f32 %v1344, %v1345
        %v1347 = vrot.slane %v1346, 4
        %v1348 = vadd.f32 %v1346, %v1347
        %v1349 = vrot.slane %v1348, 2
        %v1350 = vadd.f32 %v1348, %v1349
        %v1351 = vrot.slane %v1350, 1
        %v1352 = vadd.f32 %v1350, %v1351
        %v1353 = vadd.f32 %v1268, %v1352
        %v1354 = vmax.f32 %v1257, %v1258
        %v1355 = vrot.slane %v1354, 4
        %v1356 = vmax.f32 %v1354, %v1355
        %v1357 = vrot.slane %v1356, 2
        %v1358 = vmax.f32 %v1356, %v1357
        %v1359 = vrot.slane %v1358, 1
        %v1360 = vmax.f32 %v1358, %v1359
        %v1361 = vsub.f32 %v1257, %v1360
        %v1362 = vsub.f32 %v1258, %v1360
        %v1363 = vmul.f32 %v1361, 1.442695
        %v1364 = vpow.pop %v1363
        %v1365 = vmul.f32 %v1362, 1.442695
        %v1366 = vpow.pop %v1365
        %1367 = vmatprep.subr.mxu0 0.0
        %1368 = vmatpush1.msra.mxu0 %v1364
        %1369 = vmatprep.subr.mxu0 0.0
        %1370 = vmatpush1.msra.mxu0 %v1366
        %1371 = vmatprep.subr.mxu0 0.0
        %1372 = vmatpush1.msra.mxu0 0.0
        %1373 = vmatprep.subr.mxu0 0.0
        %1374 = vmatpush1.msra.mxu0 0.0
        %1375 = vmatprep.subr.mxu0 0.0
        %1376 = vmatpush1.msra.mxu0 0.0
        %1377 = vmatprep.subr.mxu0 0.0
        %1378 = vmatpush1.msra.mxu0 0.0
        %1379 = vmatprep.subr.mxu0 0.0
        %1380 = vmatpush1.msra.mxu0 0.0
        %1381 = vmatprep.subr.mxu0 0.0
        %1382 = vmatpush1.msra.mxu0 0.0
        %1383 = vmatprep.subr.mxu0 0.0
        %1384 = vmatpush1.msra.mxu0 0.0
        %1385 = vmatprep.subr.mxu0 0.0
        %1386 = vmatpush1.msra.mxu0 0.0
        %1387 = vmatprep.subr.mxu0 0.0
        %1388 = vmatpush1.msra.mxu0 0.0
        %1389 = vmatprep.subr.mxu0 0.0
        %1390 = vmatpush1.msra.mxu0 0.0
        %1391 = vmatprep.subr.mxu0 0.0
        %1392 = vmatpush1.msra.mxu0 0.0
        %1393 = vmatprep.subr.mxu0 0.0
        %1394 = vmatpush1.msra.mxu0 0.0
        %1395 = vmatprep.subr.mxu0 0.0
        %1396 = vmatpush1.msra.mxu0 0.0
        %1397 = vmatprep.subr.mxu0 0.0
        %1398 = vmatpush1.msra.mxu0 0.0
        %1399 = vmatprep.subr.mxu0 0.0
        %1400 = vmatpush1.msra.mxu0 0.0
        %1401 = vmatprep.subr.mxu0 0.0
        %1402 = vmatpush1.msra.mxu0 0.0
        %1403 = vmatprep.subr.mxu0 0.0
        %1404 = vmatpush1.msra.mxu0 0.0
        %1405 = vmatprep.subr.mxu0 0.0
        %1406 = vmatpush1.msra.mxu0 0.0
        %1407 = vmatprep.subr.mxu0 0.0
        %1408 = vmatpush1.msra.mxu0 0.0
        %1409 = vmatprep.subr.mxu0 0.0
        %1410 = vmatpush1.msra.mxu0 0.0
        %1411 = vmatprep.subr.mxu0 0.0
        %1412 = vmatpush1.msra.mxu0 0.0
        %1413 = vmatprep.subr.mxu0 0.0
        %1414 = vmatpush1.msra.mxu0 0.0
        %1415 = vmatprep.subr.mxu0 0.0
        %1416 = vmatpush1.msra.mxu0 0.0
        %1417 = vmatprep.subr.mxu0 0.0
        %1418 = vmatpush1.msra.mxu0 0.0
        %1419 = vmatprep.subr.mxu0 0.0
        %1420 = vmatpush1.msra.mxu0 0.0
        %1421 = vmatprep.subr.mxu0 0.0
        %1422 = vmatpush1.msra.mxu0 0.0
        %1423 = vmatprep.subr.mxu0 0.0
        %1424 = vmatpush1.msra.mxu0 0.0
        %1425 = vmatprep.subr.mxu0 0.0
        %1426 = vmatpush1.msra.mxu0 0.0
        %1427 = vmatprep.subr.mxu0 0.0
        %1428 = vmatpush1.msra.mxu0 0.0
        %1429 = vmatprep.subr.mxu0 0.0
        %1430 = vmatpush1.msra.mxu0 0.0
        %1431 = vmatprep.mubr.f32.mxu0 0.0
        %1432 = vmatmul.mubr.f32.gmra.mrb[0].mxu0 %v397
        %v1433 = vpop.f32.mrb[0].mxu0
        %v1434 = vadd.f32 0.0, %v1433
        %v1435 = vpop.f32.mrb[0].mxu0
        %1436 = vmatprep.mubr.f32.mxu0 0.0
        %1437 = vmatmul.mubr.f32.gmra.mrb[0].mxu0 %v400
        %v1438 = vpop.f32.mrb[0].mxu0
        %v1439 = vadd.f32 0.0, %v1438
        %v1440 = vpop.f32.mrb[0].mxu0
        %1441 = vdwg.mxu0
        %v1442 = vlog2.pop %v1434
        %v1443 = vmul.f32 %v1442, 0.6931472
        %v1444 = vlog2.pop %v1439
        %v1445 = vmul.f32 %v1444, 0.6931472
        %v1446 = vadd.f32 %v1443, %v1360
        %v1447 = vadd.f32 %v1445, %v1360
        %v1448 = vadd.f32 %v1446, %v263
        %v1449 = vadd.f32 %v1447, %v266
        %v1450 = vadd.f32 %v1448, %v240
        %v1451 = vadd.f32 %v1449, %v241
        %v1452 = vmul.f32 %v242, %v258
        %v1453 = vmul.f32 %v243, %v259
        %v1454 = vadd.f32 %v1452, %v1453
        %v1455 = vrot.slane %v1454, 4
        %v1456 = vadd.f32 %v1454, %v1455
        %v1457 = vrot.slane %v1456, 2
        %v1458 = vadd.f32 %v1456, %v1457
        %v1459 = vrot.slane %v1458, 1
        %v1460 = vadd.f32 %v1458, %v1459
        %v1461 = vadd.f32 %v1353, %v1460
        %1462 = vmatprep.subr.mxu0 0.0
        %1463 = vmatpush1.msra.mxu0 %v256
        %1464 = vmatprep.subr.mxu0 0.0
        %1465 = vmatpush1.msra.mxu0 %v257
        %1466 = vmatprep.subr.mxu0 0.0
        %1467 = vmatpush1.msra.mxu0 0.0
        %1468 = vmatprep.subr.mxu0 0.0
        %1469 = vmatpush1.msra.mxu0 0.0
        %1470 = vmatprep.subr.mxu0 0.0
        %1471 = vmatpush1.msra.mxu0 0.0
        %1472 = vmatprep.subr.mxu0 0.0
        %1473 = vmatpush1.msra.mxu0 0.0
        %1474 = vmatprep.subr.mxu0 0.0
        %1475 = vmatpush1.msra.mxu0 0.0
        %1476 = vmatprep.subr.mxu0 0.0
        %1477 = vmatpush1.msra.mxu0 0.0
        %1478 = vmatprep.subr.mxu0 0.0
        %1479 = vmatpush1.msra.mxu0 0.0
        %1480 = vmatprep.subr.mxu0 0.0
        %1481 = vmatpush1.msra.mxu0 0.0
        %1482 = vmatprep.subr.mxu0 0.0
        %1483 = vmatpush1.msra.mxu0 0.0
        %1484 = vmatprep.subr.mxu0 0.0
        %1485 = vmatpush1.msra.mxu0 0.0
        %1486 = vmatprep.subr.mxu0 0.0
        %1487 = vmatpush1.msra.mxu0 0.0
        %1488 = vmatprep.subr.mxu0 0.0
        %1489 = vmatpush1.msra.mxu0 0.0
        %1490 = vmatprep.subr.mxu0 0.0
        %1491 = vmatpush1.msra.mxu0 0.0
        %1492 = vmatprep.subr.mxu0 0.0
        %1493 = vmatpush1.msra.mxu0 0.0
        %1494 = vmatprep.subr.mxu0 0.0
        %1495 = vmatpush1.msra.mxu0 0.0
        %1496 = vmatprep.subr.mxu0 0.0
        %1497 = vmatpush1.msra.mxu0 0.0
        %1498 = vmatprep.subr.mxu0 0.0
        %1499 = vmatpush1.msra.mxu0 0.0
        %1500 = vmatprep.subr.mxu0 0.0
        %1501 = vmatpush1.msra.mxu0 0.0
        %1502 = vmatprep.subr.mxu0 0.0
        %1503 = vmatpush1.msra.mxu0 0.0
        %1504 = vmatprep.subr.mxu0 0.0
        %1505 = vmatpush1.msra.mxu0 0.0
        %1506 = vmatprep.subr.mxu0 0.0
        %1507 = vmatpush1.msra.mxu0 0.0
        %1508 = vmatprep.subr.mxu0 0.0
        %1509 = vmatpush1.msra.mxu0 0.0
        %1510 = vmatprep.subr.mxu0 0.0
        %1511 = vmatpush1.msra.mxu0 0.0
        %1512 = vmatprep.subr.mxu0 0.0
        %1513 = vmatpush1.msra.mxu0 0.0
        %1514 = vmatprep.subr.mxu0 0.0
        %1515 = vmatpush1.msra.mxu0 0.0
        %1516 = vmatprep.subr.mxu0 0.0
        %1517 = vmatpush1.msra.mxu0 0.0
        %1518 = vmatprep.subr.mxu0 0.0
        %1519 = vmatpush1.msra.mxu0 0.0
        %1520 = vmatprep.subr.mxu0 0.0
        %1521 = vmatpush1.msra.mxu0 0.0
        %1522 = vmatprep.subr.mxu0 0.0
        %1523 = vmatpush1.msra.mxu0 0.0
        %1524 = vmatprep.subr.mxu0 0.0
        %1525 = vmatpush1.msra.mxu0 0.0
        %1526 = vmatprep.mubr.f32.mxu0 0.0
        %1527 = vmatmul.mubr.f32.gmra.mrb[0].mxu0 %v293
        %v1528 = vpop.f32.mrb[0].mxu0
        %v1529 = vadd.f32 0.0, %v1528
        %v1530 = vpop.f32.mrb[0].mxu0
        %1531 = vmatprep.mubr.f32.mxu0 0.0
        %1532 = vmatmul.mubr.f32.gmra.mrb[0].mxu0 %v296
        %v1533 = vpop.f32.mrb[0].mxu0
        %v1534 = vadd.f32 0.0, %v1533
        %v1535 = vpop.f32.mrb[0].mxu0
        %1536 = vdwg.mxu0
        %v1537 = vmul.f32 %v258, %v1529
        %v1538 = vmul.f32 %v259, %v1534
        %v1539 = vadd.f32 %v1537, %v1538
        %v1540 = vrot.slane %v1539, 4
        %v1541 = vadd.f32 %v1539, %v1540
        %v1542 = vrot.slane %v1541, 2
        %v1543 = vadd.f32 %v1541, %v1542
        %v1544 = vrot.slane %v1543, 1
        %v1545 = vadd.f32 %v1543, %v1544
        %v1546 = vadd.f32 %v1461, %v1545
        %v1547 = vmax.f32 %v1450, %v1451
        %v1548 = vrot.slane %v1547, 4
        %v1549 = vmax.f32 %v1547, %v1548
        %v1550 = vrot.slane %v1549, 2
        %v1551 = vmax.f32 %v1549, %v1550
        %v1552 = vrot.slane %v1551, 1
        %v1553 = vmax.f32 %v1551, %v1552
        %v1554 = vsub.f32 %v1450, %v1553
        %v1555 = vsub.f32 %v1451, %v1553
        %v1556 = vmul.f32 %v1554, 1.442695
        %v1557 = vpow.pop %v1556
        %v1558 = vmul.f32 %v1555, 1.442695
        %v1559 = vpow.pop %v1558
        %1560 = vmatprep.subr.mxu0 0.0
        %1561 = vmatpush1.msra.mxu0 %v1557
        %1562 = vmatprep.subr.mxu0 0.0
        %1563 = vmatpush1.msra.mxu0 %v1559
        %1564 = vmatprep.subr.mxu0 0.0
        %1565 = vmatpush1.msra.mxu0 0.0
        %1566 = vmatprep.subr.mxu0 0.0
        %1567 = vmatpush1.msra.mxu0 0.0
        %1568 = vmatprep.subr.mxu0 0.0
        %1569 = vmatpush1.msra.mxu0 0.0
        %1570 = vmatprep.subr.mxu0 0.0
        %1571 = vmatpush1.msra.mxu0 0.0
        %1572 = vmatprep.subr.mxu0 0.0
        %1573 = vmatpush1.msra.mxu0 0.0
        %1574 = vmatprep.subr.mxu0 0.0
        %1575 = vmatpush1.msra.mxu0 0.0
        %1576 = vmatprep.subr.mxu0 0.0
        %1577 = vmatpush1.msra.mxu0 0.0
        %1578 = vmatprep.subr.mxu0 0.0
        %1579 = vmatpush1.msra.mxu0 0.0
        %1580 = vmatprep.subr.mxu0 0.0
        %1581 = vmatpush1.msra.mxu0 0.0
        %1582 = vmatprep.subr.mxu0 0.0
        %1583 = vmatpush1.msra.mxu0 0.0
        %1584 = vmatprep.subr.mxu0 0.0
        %1585 = vmatpush1.msra.mxu0 0.0
        %1586 = vmatprep.subr.mxu0 0.0
        %1587 = vmatpush1.msra.mxu0 0.0
        %1588 = vmatprep.subr.mxu0 0.0
        %1589 = vmatpush1.msra.mxu0 0.0
        %1590 = vmatprep.subr.mxu0 0.0
        %1591 = vmatpush1.msra.mxu0 0.0
        %1592 = vmatprep.subr.mxu0 0.0
        %1593 = vmatpush1.msra.mxu0 0.0
        %1594 = vmatprep.subr.mxu0 0.0
        %1595 = vmatpush1.msra.mxu0 0.0
        %1596 = vmatprep.subr.mxu0 0.0
        %1597 = vmatpush1.msra.mxu0 0.0
        %1598 = vmatprep.subr.mxu0 0.0
        %1599 = vmatpush1.msra.mxu0 0.0
        %1600 = vmatprep.subr.mxu0 0.0
        %1601 = vmatpush1.msra.mxu0 0.0
        %1602 = vmatprep.subr.mxu0 0.0
        %1603 = vmatpush1.msra.mxu0 0.0
        %1604 = vmatprep.subr.mxu0 0.0
        %1605 = vmatpush1.msra.mxu0 0.0
        %1606 = vmatprep.subr.mxu0 0.0
        %1607 = vmatpush1.msra.mxu0 0.0
        %1608 = vmatprep.subr.mxu0 0.0
        %1609 = vmatpush1.msra.mxu0 0.0
        %1610 = vmatprep.subr.mxu0 0.0
        %1611 = vmatpush1.msra.mxu0 0.0
        %1612 = vmatprep.subr.mxu0 0.0
        %1613 = vmatpush1.msra.mxu0 0.0
        %1614 = vmatprep.subr.mxu0 0.0
        %1615 = vmatpush1.msra.mxu0 0.0
        %1616 = vmatprep.subr.mxu0 0.0
        %1617 = vmatpush1.msra.mxu0 0.0
        %1618 = vmatprep.subr.mxu0 0.0
        %1619 = vmatpush1.msra.mxu0 0.0
        %1620 = vmatprep.subr.mxu0 0.0
        %1621 = vmatpush1.msra.mxu0 0.0
        %1622 = vmatprep.subr.mxu0 0.0
        %1623 = vmatpush1.msra.mxu0 0.0
        %1624 = vmatprep.mubr.f32.mxu0 0.0
        %1625 = vmatmul.mubr.f32.gmra.mrb[0].mxu0 %v397
        %v1626 = vpop.f32.mrb[0].mxu0
        %v1627 = vadd.f32 0.0, %v1626
        %v1628 = vpop.f32.mrb[0].mxu0
        %1629 = vmatprep.mubr.f32.mxu0 0.0
        %1630 = vmatmul.mubr.f32.gmra.mrb[0].mxu0 %v400
        %v1631 = vpop.f32.mrb[0].mxu0
        %v1632 = vadd.f32 0.0, %v1631
        %v1633 = vpop.f32.mrb[0].mxu0
        %1634 = vdwg.mxu0
        %v1635 = vlog2.pop %v1627
        %v1636 = vmul.f32 %v1635, 0.6931472
        %v1637 = vlog2.pop %v1632
        %v1638 = vmul.f32 %v1637, 0.6931472
        %v1639 = vadd.f32 %v1636, %v1553
        %v1640 = vadd.f32 %v1638, %v1553
        %v1641 = vadd.f32 %v1639, %v263
        %v1642 = vadd.f32 %v1640, %v266
        %v1643 = vadd.f32 %v1641, %v242
        %v1644 = vadd.f32 %v1642, %v243
        %v1645 = vmax.f32 %v1643, %v1644
        %v1646 = vrot.slane %v1645, 4
        %v1647 = vmax.f32 %v1645, %v1646
        %v1648 = vrot.slane %v1647, 2
        %v1649 = vmax.f32 %v1647, %v1648
        %v1650 = vrot.slane %v1649, 1
        %v1651 = vmax.f32 %v1649, %v1650
        %v1652 = vsub.f32 %v1643, %v1651
        %v1653 = vsub.f32 %v1644, %v1651
        %v1654 = vmul.f32 %v1652, 1.442695
        %v1655 = vpow.pop %v1654
        %v1656 = vmul.f32 %v1653, 1.442695
        %v1657 = vpow.pop %v1656
        %v1658 = vadd.f32 %v1655, %v1657
        %v1659 = vrot.slane %v1658, 4
        %v1660 = vadd.f32 %v1658, %v1659
        %v1661 = vrot.slane %v1660, 2
        %v1662 = vadd.f32 %v1660, %v1661
        %v1663 = vrot.slane %v1662, 1
        %v1664 = vadd.f32 %v1662, %v1663
        %v1665 = vlog2.pop %v1664
        %v1666 = vmul.f32 %v1665, 0.6931472
        %v1667 = vadd.f32 %v1666, %v1651
        %v1668 = vsub.f32 %v1667, %v1546
        %1669 = vst [vmem:[%s225] sm:$0x1] %v1668
        %s1670 = sand.u32 %s104, 1
        %s1671 = scalar_lea.sflag [#allocation4], %s1670
        %s1672 = sand.u32 %s104, 1
        %s1673 = scalar_lea.vmem [#allocation7], %s1672
        // Predicated region
        $region41: #{mrf_lin_nll_batch.1} parent=31 // pred_check
          %p1674 = pneg %p114
        $region42: #{mrf_lin_nll_batch.1} parent=31 // pred_check_branch
          %1676 = sbr.rel (%p1674) target = $region44
        $region43: #{mrf_lin_nll_batch.1} parent=31 // pred_region
          %s1678 = ssub.s32 16, 16
          %1679 = vsyncadd %s1671, %s1678
          %s1680 = smul.addr %s23, 16
          %s1681 = scalar_lea.hbm %s3, %s1680
          %s1683 = sshll.u32 %s1673, 4
          %s1684 = int_to_ptr.vmem [resolvable:$true] %s1683
          %1686 = dma.vmem_to_hbm [thread:$0]  %s1684, 16, %s1681, %s1671
        $region44: #{mrf_lin_nll_batch.1} parent=31 // pred_fallthru
          _
      $region32: #{mrf_lin_nll_batch.1} parent=5 // pred_fallthru
        _
      %p1687 = scmp.le.s32.totalorder 2, %s18
      // Predicated region
      $region45: #{mrf_lin_nll_batch.1} parent=5 // pred_check
        %p1688 = pneg %p1687
      $region46: #{mrf_lin_nll_batch.1} parent=5 // pred_check_branch
        %1690 = sbr.rel (%p1688) target = $region48
      $region47: #{mrf_lin_nll_batch.1} parent=5 // pred_region
        %s1691 = ssub.s32 %s18, 2
        // Predicated region
        $region49: #{mrf_lin_nll_batch.1} parent=47 // pred_check
          %p1692 = pneg %p120
        $region50: #{mrf_lin_nll_batch.1} parent=47 // pred_check_branch
          %1694 = sbr.rel (%p1692) target = $region52
        $region51: #{mrf_lin_nll_batch.1} parent=47 // pred_region
          %s1695 = sand.u32 %s105, 1
          %s1696 = scalar_lea.sflag [#allocation4], %s1695
          %s1697 = sand.u32 %s105, 1
          %s1698 = scalar_lea.vmem [#allocation7], %s1697
          %1699 = dma.done %s1696, 16
        $region52: #{mrf_lin_nll_batch.1} parent=47 // pred_fallthru
          _
      $region48: #{mrf_lin_nll_batch.1} parent=5 // pred_fallthru
        _
    $region6: #{mrf_lin_nll_batch.1} parent=1 // loop_footer
      %s22 = sadd.s32 1, %s18
    $region7: #{mrf_lin_nll_batch.1} parent=1 // loop_footer_branch
      %17 = sbr.rel target = $region3
    $region8: #{mrf_lin_nll_batch.1} parent=1 // loop_exit
      _
    %1700 = vsyncpa [#allocation3], 1
    %s1701 = scalar_lea.sflag [#allocation3], 1
    %1702 = vsyncpa %s1701, 1
    %1703 = vsyncpa [#allocation6], 1
    %s1704 = scalar_lea.sflag [#allocation6], 1
    %1705 = vsyncpa %s1704, 1
    %1706 = vsyncpa [#allocation4], 1
    %s1707 = scalar_lea.sflag [#allocation4], 1
    %1708 = vsyncpa %s1707, 1

</llo_original>
